<compile_context>
chip_gen: v7x
topology: tpu7x:2x2x1
jax: 0.10.0
libtpu: 0.0.40
codegen_flags: <defaults>
</compile_context>

<pallas_src>
import functools

import jax
import jax.numpy as jnp
from jax import lax
from jax.experimental import pallas as pl
from jax.experimental.pallas import tpu as pltpu


def _cdiv(a, b):
    return -(-a // b)


def _online_smoothing_ce_kernel(y_pred_ref, y_true_ref, soft_mw_ref, *out_refs,
                                total_rows, steps_per_core, tile_rows,
                                train_mode):
    """One (tile_rows, C) tile of the flattened batch.

    Grid = (num_cores, steps_per_core); axis 0 is "parallel" (megacore split),
    axis 1 is "arbitrary" and carries the per-core resident accumulators
    (loss sum, valid count, stats delta, counter delta) which are zero-init at
    step 0 and reduced across cores by the wrapper.
    """
    if train_mode:
        loss_ref, nvalid_ref, stats_ref, counter_ref = out_refs
    else:
        loss_ref, nvalid_ref = out_refs

    core = pl.program_id(0)
    step = pl.program_id(1)

    # ---- zero the per-core resident accumulators on the first step ----
    @pl.when(step == 0)
    def _():
        loss_ref[...] = jnp.zeros_like(loss_ref)
        nvalid_ref[...] = jnp.zeros_like(nvalid_ref)
        if train_mode:
            stats_ref[...] = jnp.zeros_like(stats_ref)
            counter_ref[...] = jnp.zeros_like(counter_ref)

    # f32 compute on the VPU/EUP everywhere (v5e has no bf16 vector ALUs);
    # only the MXU operands are cast (to soft_mw_ref.dtype) at the dots.
    logits = y_pred_ref[...].astype(jnp.float32)         # (TN, C)
    labels = y_true_ref[...]                             # (TN, 1) int32
    tn, ncls = logits.shape
    mxu_dtype = soft_mw_ref.dtype

    # Rows outside the real N (partial / clamped tiles): treat as ignored
    # (label == -1) and zero their logits so no garbage reaches the math.
    row = lax.broadcasted_iota(jnp.int32, (tn, 1), 0)
    row_start = (core * steps_per_core + step) * tile_rows
    in_range = (row_start + row) < total_rows             # (TN, 1) bool
    labels = jnp.where(in_range, labels, -1)
    logits = jnp.where(in_range, logits, 0.0)

    # ---- numerically stable softmax / log-softmax (classes on lanes) ----
    m = jnp.max(logits, axis=-1, keepdims=True)            # (TN, 1)
    z = logits - m
    e = jnp.exp(z)
    s = jnp.sum(e, axis=-1, keepdims=True)                 # (TN, 1)
    logsm = z - jnp.log(s)                                 # exact -> loss path

    col = lax.broadcasted_iota(jnp.int32, (tn, ncls), 1)
    onehot = (col == labels).astype(jnp.float32)           # label==-1 -> zero row
    valid = (labels != -1).astype(jnp.float32)             # (TN, 1)

    # Soft labels with class_weight pre-folded: soft_mw[y_true] == onehot @ soft_mw.
    soft_w = jnp.dot(onehot.astype(mxu_dtype), soft_mw_ref[...],
                     preferred_element_type=jnp.float32)              # (TN, C)
    per_sample = -jnp.sum(soft_w * logsm, axis=-1, keepdims=True)     # (TN, 1)
    loss_ref[...] += jnp.sum(per_sample * valid, axis=0, keepdims=True)[None]
    nvalid_ref[...] += jnp.sum(valid, axis=0, keepdims=True)[None]

    if train_mode:
        # accumulate_model_output: stats[y] += softmax(pred); counter[y] += 1
        # for rows whose argmax equals the (valid) label.
        sm = e / s                                          # exact softmax -> stats
        # torch-style first-max tie-break, compared in f32.
        pred_class = jnp.min(jnp.where(logits == m, col, ncls),
                             axis=-1, keepdims=True)        # (TN, 1)
        match = (pred_class == labels).astype(jnp.float32)  # (TN, 1)
        sel = onehot * match                                # (TN, C)
        # sel^T @ sm: contracting dim 0 of both operands is the native MXU
        # "dW = X^T @ dY" form (no explicit transpose of sel expected).
        stats_delta = lax.dot_general(
            sel.astype(mxu_dtype), sm.astype(mxu_dtype),
            dimension_numbers=(((0,), (0,)), ((), ())),
            preferred_element_type=jnp.float32)             # (C, C)
        stats_ref[...] += stats_delta[None]
        counter_ref[...] += jnp.sum(sel, axis=0, keepdims=True)[None]


def _vmem_capacity_bytes():
    try:
        return int(pltpu.get_tpu_info().vmem_capacity_bytes)
    except Exception:
        return 64 << 20            # conservative fallback (v7x per-TC VMEM)


def _detect_num_tensorcores():
    # v7x packs 2 TensorCores per chip; v5e/v6e have 1.  Grid axis 0 is sized
    # accordingly so the N loop can be sharded across cores ("parallel").
    try:
        kind = jax.devices()[0].device_kind.lower()
    except Exception:
        return 1
    return 2 if "v7" in kind else 1


def _pick_tile_rows(n_rows, n_classes, in_itemsize, mxu_itemsize, vmem_budget,
                    max_rows=4096):
    """Largest row tile fitting the VMEM budget, counting lane padding, the
    double-buffered input tiles and ~8 live f32 temporaries per row."""
    lanes = max(128, _cdiv(n_classes, 128) * 128)
    # Resident blocks: soft_mw (double-buffered by the default pipeline) plus
    # the stats/counter/loss output blocks.
    resident = (2 * n_classes * n_classes * mxu_itemsize
                + n_classes * n_classes * 4 + 3 * lanes * 4)
    avail = max(vmem_budget - resident, 2 << 20)
    per_row = (2 * lanes * in_itemsize     # logits tile, double-buffered
               + 2 * 128 * 4               # labels tile (lane-padded), double-buffered
               + 8 * lanes * 4)            # live f32 temporaries (exp/softmax/onehot/...)
    tn = int(min(avail // per_row, max_rows))
    n_pad = _cdiv(n_rows, 8) * 8
    tn = min(tn, n_pad)
    if tn >= 128:
        tn = (tn // 128) * 128              # MXU-friendly on all generations
    else:
        tn = max((tn // 8) * 8, 8)
    return tn


def online_smoothing_ce_loss(y_pred, y_true, class_weight, soft_matrix,
                             stats_matrix, counter, train_mode=True,
                             tile_rows=None, num_cores=None):
    """Functional equivalent of OnlineSmoothingCELoss.forward.

    Returns (loss, new_stats_matrix, new_counter); in eval mode
    (train_mode=False) the accumulator state is returned unchanged, matching
    the PyTorch module (accumulate_model_output is skipped)."""
    C = y_pred.shape[-1]
    y_pred2 = y_pred.reshape(-1, C)                    # native dtype through HBM
    y_true2 = y_true.reshape(-1, 1).astype(jnp.int32)
    N = y_pred2.shape[0]

    # bf16 is the native MXU input dtype on v5e/v6e/v7x; use it when the dots
    # are big enough to matter (also halves soft_mw's resident footprint).
    # Small C stays f32 end-to-end for exactness.
    mxu_dtype = jnp.bfloat16 if C >= 128 else jnp.float32
    soft_mw = (soft_matrix.astype(jnp.float32)
               * class_weight.reshape(1, C).astype(jnp.float32)).astype(mxu_dtype)

    in_itemsize = jnp.dtype(y_pred2.dtype).itemsize
    mxu_itemsize = jnp.dtype(mxu_dtype).itemsize
    vmem_limit = int(_vmem_capacity_bytes() * 3 // 4)  # generation-aware cap

    if tile_rows is None:
        tn = _pick_tile_rows(N, C, in_itemsize, mxu_itemsize, vmem_limit)
    else:
        tn = max((int(tile_rows) // 8) * 8, 8)

    nblocks = _cdiv(N, tn)
    ncores = num_cores if num_cores is not None else _detect_num_tensorcores()
    ncores = max(1, min(ncores, nblocks))
    spc = _cdiv(nblocks, ncores)                       # grid steps per core
    grid = (ncores, spc)

    if ncores * spc > nblocks:
        # Clamp trailing block indices in-bounds; the kernel masks those rows
        # (logical position >= N) so duplicated reads contribute nothing.
        def row_block(c, i):
            return jnp.minimum(c * spc + i, nblocks - 1)
    else:
        def row_block(c, i):
            return c * spc + i

    in_specs = [
        pl.BlockSpec((tn, C), lambda c, i: (row_block(c, i), 0)),   # logits tile
        pl.BlockSpec((tn, 1), lambda c, i: (row_block(c, i), 0)),   # labels tile
        pl.BlockSpec((C, C), lambda c, i: (0, 0)),                  # soft_mw (resident)
    ]
    out_shape = [
        jax.ShapeDtypeStruct((ncores, 1, 1), jnp.float32),          # per-core loss sum
        jax.ShapeDtypeStruct((ncores, 1, 1), jnp.float32),          # per-core valid count
    ]
    out_specs = [
        pl.BlockSpec((1, 1, 1), lambda c, i: (c, 0, 0)),
        pl.BlockSpec((1, 1, 1), lambda c, i: (c, 0, 0)),
    ]
    if train_mode:
        out_shape += [
            jax.ShapeDtypeStruct((ncores, C, C), jnp.float32),      # stats delta
            jax.ShapeDtypeStruct((ncores, 1, C), jnp.float32),      # counter delta
        ]
        out_specs += [
            pl.BlockSpec((1, C, C), lambda c, i: (c, 0, 0)),
            pl.BlockSpec((1, 1, C), lambda c, i: (c, 0, 0)),
        ]

    kernel = functools.partial(
        _online_smoothing_ce_kernel,
        total_rows=N, steps_per_core=spc, tile_rows=tn, train_mode=train_mode)

    outs = pl.pallas_call(
        kernel,
        out_shape=tuple(out_shape),
        grid=grid,
        in_specs=in_specs,
        out_specs=tuple(out_specs),
        compiler_params=pltpu.CompilerParams(
            dimension_semantics=("parallel", "arbitrary"),
            vmem_limit_bytes=vmem_limit),
    )(y_pred2, y_true2, soft_mw)

    loss_sums, nvalids = outs[0], outs[1]
    # NOTE: an all-ignored batch gives 0/0 -> NaN, matching the PyTorch module.
    loss = jnp.sum(loss_sums) / jnp.sum(nvalids)

    if train_mode:
        stats_new = stats_matrix.astype(jnp.float32) + jnp.sum(outs[2], axis=0)
        counter_new = (counter.astype(jnp.float32).reshape(C)
                       + jnp.sum(outs[3], axis=(0, 1)))
    else:
        stats_new = stats_matrix
        counter_new = counter
    return loss, stats_new, counter_new


if __name__ == "__main__":
    key = jax.random.PRNGKey(0)
    B, S, C = 2, 100, 8               # batch, sequence, class_num
    smooth_ratio = 0.1

    k1, k2, k3 = jax.random.split(key, 3)
    y_pred = jax.random.normal(k1, (B, S, C), dtype=jnp.float32)
    # labels in [-1, C); -1 marks ignored positions
    y_true = jax.random.randint(k2, (B, S), minval=-1, maxval=C, dtype=jnp.int32)

    class_weight = jnp.linspace(0.5, 1.5, C, dtype=jnp.float32)
    soft_matrix = (jnp.eye(C, dtype=jnp.float32) * (1.0 - smooth_ratio)
                   + smooth_ratio / C)
    # Non-zero running buffers so the accumulate-into-existing path is exercised.
    stats_matrix = 0.01 * jax.random.uniform(k3, (C, C), dtype=jnp.float32)
    counter = 0.5 * jnp.arange(C, dtype=jnp.float32)

    # ---- pure-JAX reference ----
    yp = y_pred.reshape(-1, C)
    yt = y_true.reshape(-1)
    ref_logsm = jax.nn.log_softmax(yp, axis=-1)
    ref_sm = jax.nn.softmax(yp, axis=-1)
    ref_onehot = (yt[:, None] == jnp.arange(C)[None, :]).astype(jnp.float32)
    ref_valid = (yt != -1).astype(jnp.float32)
    ref_soft = ref_onehot @ soft_matrix
    ref_per = -jnp.sum(class_weight[None, :] * ref_soft * ref_logsm, axis=-1)
    ref_loss = jnp.sum(ref_per * ref_valid) / jnp.sum(ref_valid)
    ref_match = (jnp.argmax(yp, axis=-1) == yt).astype(jnp.float32)
    ref_stats = stats_matrix + (ref_onehot * ref_match[:, None]).T @ ref_sm
    ref_counter = counter + jnp.sum(ref_onehot * ref_match[:, None], axis=0)

    # Train path: 64-row tiles over N=200 -> 4 grid steps, last one partial.
    loss, stats_new, counter_new = online_smoothing_ce_loss(
        y_pred, y_true, class_weight, soft_matrix, stats_matrix, counter,
        train_mode=True, tile_rows=64)
    jax.block_until_ready((loss, stats_new, counter_new))

    assert jnp.allclose(loss, ref_loss, atol=1e-4, rtol=1e-4), (loss, ref_loss)
    assert jnp.allclose(stats_new, ref_stats, atol=1e-4, rtol=1e-4)
    assert jnp.allclose(counter_new, ref_counter, atol=1e-4, rtol=1e-4)

    # Eval path: auto tile pick, stats path skipped, state returned unchanged.
    loss_eval, stats_eval, counter_eval = online_smoothing_ce_loss(
        y_pred, y_true, class_weight, soft_matrix, stats_matrix, counter,
        train_mode=False)
    jax.block_until_ready(loss_eval)
    assert jnp.allclose(loss_eval, ref_loss, atol=1e-4, rtol=1e-4)
    assert jnp.allclose(stats_eval, stats_matrix)
    assert jnp.allclose(counter_eval, counter)

    print("KERNEL_OK")
</pallas_src>

<mosaic_0001>
module attributes {stable_mosaic.version = 11 : i64} {
  func.func @_online_smoothing_ce_kernel(%arg0: i32, %arg1: i32, %arg2: memref<64x8xf32, #tpu.memory_space<vmem>>, %arg3: memref<64x1xi32, #tpu.memory_space<vmem>>, %arg4: memref<8x8xf32, #tpu.memory_space<vmem>>, %arg5: memref<1x1x1xf32, #tpu.memory_space<vmem>>, %arg6: memref<1x1x1xf32, #tpu.memory_space<vmem>>, %arg7: memref<1x8x8xf32, #tpu.memory_space<vmem>>, %arg8: memref<1x1x8xf32, #tpu.memory_space<vmem>>) attributes {dimension_semantics = [#tpu.dimension_semantics<parallel>, #tpu.dimension_semantics<arbitrary>], iteration_bounds = array<i64: 1, 4>, scalar_prefetch = 0 : i64, scratch_operands = 0 : i64, tpu.core_type = #tpu.core_type<tc>, window_params = [{transform_indices = @transform_0, window_bounds = array<i64: 64, 8>}, {transform_indices = @transform_1, window_bounds = array<i64: 64, 1>}, {pipeline_mode = #tpu.pipeline_mode<synchronous>, transform_indices = @transform_2, window_bounds = array<i64: 8, 8>}, {transform_indices = @transform_3, window_bounds = array<i64: 1, 1, 1>}, {transform_indices = @transform_4, window_bounds = array<i64: 1, 1, 1>}, {transform_indices = @transform_5, window_bounds = array<i64: 1, 8, 8>}, {transform_indices = @transform_6, window_bounds = array<i64: 1, 1, 8>}]} {
    %c0_i32 = arith.constant 0 : i32
    %0 = arith.cmpi eq, %arg1, %c0_i32 : i32
    %1 = arith.extui %0 : i1 to i32
    %c0_i32_0 = arith.constant 0 : i32
    %2 = arith.cmpi ne, %1, %c0_i32_0 : i32
    scf.if %2 {
      %cst_41 = arith.constant 0.000000e+00 : f32
      %82 = vector.broadcast %cst_41 : f32 to vector<1x1x1xf32>
      %c0_42 = arith.constant 0 : index
      %c0_43 = arith.constant 0 : index
      %c0_44 = arith.constant 0 : index
      %83 = vector.load %arg5[%c0_42, %c0_43, %c0_44] : memref<1x1x1xf32, #tpu.memory_space<vmem>>, vector<1x1x1xf32>
      tpu.vector_store %arg5[%c0_42, %c0_43, %c0_44], %82 {strides = array<i32>} : memref<1x1x1xf32, #tpu.memory_space<vmem>>, vector<1x1x1xf32>,
      %cst_45 = arith.constant 0.000000e+00 : f32
      %84 = vector.broadcast %cst_45 : f32 to vector<1x1x1xf32>
      %c0_46 = arith.constant 0 : index
      %c0_47 = arith.constant 0 : index
      %c0_48 = arith.constant 0 : index
      %85 = vector.load %arg6[%c0_46, %c0_47, %c0_48] : memref<1x1x1xf32, #tpu.memory_space<vmem>>, vector<1x1x1xf32>
      tpu.vector_store %arg6[%c0_46, %c0_47, %c0_48], %84 {strides = array<i32>} : memref<1x1x1xf32, #tpu.memory_space<vmem>>, vector<1x1x1xf32>,
      %cst_49 = arith.constant 0.000000e+00 : f32
      %86 = vector.broadcast %cst_49 : f32 to vector<1x8x8xf32>
      %c0_50 = arith.constant 0 : index
      %c0_51 = arith.constant 0 : index
      %c0_52 = arith.constant 0 : index
      %87 = vector.load %arg7[%c0_50, %c0_51, %c0_52] : memref<1x8x8xf32, #tpu.memory_space<vmem>>, vector<1x8x8xf32>
      tpu.vector_store %arg7[%c0_50, %c0_51, %c0_52], %86 {strides = array<i32>} : memref<1x8x8xf32, #tpu.memory_space<vmem>>, vector<1x8x8xf32>,
      %cst_53 = arith.constant 0.000000e+00 : f32
      %88 = vector.broadcast %cst_53 : f32 to vector<1x1x8xf32>
      %c0_54 = arith.constant 0 : index
      %c0_55 = arith.constant 0 : index
      %c0_56 = arith.constant 0 : index
      %89 = vector.load %arg8[%c0_54, %c0_55, %c0_56] : memref<1x1x8xf32, #tpu.memory_space<vmem>>, vector<1x1x8xf32>
      tpu.vector_store %arg8[%c0_54, %c0_55, %c0_56], %88 {strides = array<i32>} : memref<1x1x8xf32, #tpu.memory_space<vmem>>, vector<1x1x8xf32>,
    } else {
    }
    %c0 = arith.constant 0 : index
    %c0_1 = arith.constant 0 : index
    %3 = vector.load %arg2[%c0, %c0_1] : memref<64x8xf32, #tpu.memory_space<vmem>>, vector<64x8xf32>
    %c0_2 = arith.constant 0 : index
    %c0_3 = arith.constant 0 : index
    %4 = vector.load %arg3[%c0_2, %c0_3] : memref<64x1xi32, #tpu.memory_space<vmem>>, vector<64x1xi32>
    %5 = tpu.iota {dimensions = array<i32: 0>} : vector<64x1xi32>
    %c4_i32 = arith.constant 4 : i32
    %6 = arith.muli %arg0, %c4_i32 : i32
    %7 = arith.addi %6, %arg1 : i32
    %c64_i32 = arith.constant 64 : i32
    %8 = arith.muli %7, %c64_i32 : i32
    %9 = vector.broadcast %8 : i32 to vector<64x1xi32>
    %10 = arith.addi %9, %5 : vector<64x1xi32>
    %c200_i32 = arith.constant 200 : i32
    %11 = vector.broadcast %c200_i32 : i32 to vector<64x1xi32>
    %12 = arith.cmpi slt, %10, %11 : vector<64x1xi32>
    %c-1_i32 = arith.constant -1 : i32
    %13 = vector.broadcast %c-1_i32 : i32 to vector<64x1xi32>
    %14 = arith.select %12, %4, %13 : vector<64x1xi1>, vector<64x1xi32>
    %cst = arith.constant 0.000000e+00 : f32
    %15 = vector.shape_cast %12 : vector<64x1xi1> to vector<64x1xi1>
    %16 = vector.broadcast %15 : vector<64x1xi1> to vector<64x8xi1>
    %17 = vector.broadcast %cst : f32 to vector<64x8xf32>
    %18 = arith.select %16, %3, %17 : vector<64x8xi1>, vector<64x8xf32>
    %cst_4 = arith.constant dense<0xFF800000> : vector<64xf32>
    %19 = vector.multi_reduction <maximumf>, %18, %cst_4 [1] : vector<64x8xf32> to vector<64xf32>
    %20 = vector.shape_cast %19 : vector<64xf32> to vector<64x1xf32>
    %21 = vector.broadcast %20 : vector<64x1xf32> to vector<64x8xf32>
    %22 = arith.subf %18, %21 : vector<64x8xf32>
    %23 = math.exp %22 : vector<64x8xf32>
    %cst_5 = arith.constant dense<0.000000e+00> : vector<64xf32>
    %24 = vector.multi_reduction <add>, %23, %cst_5 [1] : vector<64x8xf32> to vector<64xf32>
    %25 = vector.shape_cast %24 : vector<64xf32> to vector<64x1xf32>
    %26 = math.log %25 : vector<64x1xf32>
    %27 = vector.broadcast %26 : vector<64x1xf32> to vector<64x8xf32>
    %28 = arith.subf %22, %27 : vector<64x8xf32>
    %29 = tpu.iota {dimensions = array<i32: 1>} : vector<64x8xi32>
    %30 = vector.broadcast %14 : vector<64x1xi32> to vector<64x8xi32>
    %31 = arith.cmpi eq, %29, %30 : vector<64x8xi32>
    %32 = arith.extui %31 : vector<64x8xi1> to vector<64x8xi32>
    %33 = arith.sitofp %32 : vector<64x8xi32> to vector<64x8xf32>
    %c-1_i32_6 = arith.constant -1 : i32
    %34 = vector.broadcast %c-1_i32_6 : i32 to vector<64x1xi32>
    %35 = arith.cmpi ne, %14, %34 : vector<64x1xi32>
    %36 = arith.extui %35 : vector<64x1xi1> to vector<64x1xi32>
    %37 = arith.sitofp %36 : vector<64x1xi32> to vector<64x1xf32>
    %c0_7 = arith.constant 0 : index
    %c0_8 = arith.constant 0 : index
    %38 = vector.load %arg4[%c0_7, %c0_8] : memref<8x8xf32, #tpu.memory_space<vmem>>, vector<8x8xf32>
    %cst_9 = arith.constant dense<0.000000e+00> : vector<64x8xf32>
    %39 = tpu.matmul %33, %38, %cst_9 {dimension_numbers = #tpu.dot_dimension_numbers<[1], [0], [0], [1], [0, 0, 1, 1], [], []>} : vector<64x8xf32>, vector<8x8xf32>, vector<64x8xf32> -> vector<64x8xf32>
    %40 = arith.mulf %39, %28 : vector<64x8xf32>
    %cst_10 = arith.constant dense<0.000000e+00> : vector<64xf32>
    %41 = vector.multi_reduction <add>, %40, %cst_10 [1] : vector<64x8xf32> to vector<64xf32>
    %42 = vector.shape_cast %41 : vector<64xf32> to vector<64x1xf32>
    %cst_11 = arith.constant 0.000000e+00 : f32
    %43 = vector.broadcast %cst_11 : f32 to vector<64x1xf32>
    %44 = arith.subf %43, %42 : vector<64x1xf32>
    %c0_12 = arith.constant 0 : index
    %c0_13 = arith.constant 0 : index
    %c0_14 = arith.constant 0 : index
    %45 = vector.load %arg5[%c0_12, %c0_13, %c0_14] : memref<1x1x1xf32, #tpu.memory_space<vmem>>, vector<1x1x1xf32>
    %46 = arith.mulf %44, %37 : vector<64x1xf32>
    %cst_15 = arith.constant dense<0.000000e+00> : vector<1xf32>
    %47 = vector.multi_reduction <add>, %46, %cst_15 [0] : vector<64x1xf32> to vector<1xf32>
    %48 = vector.shape_cast %47 : vector<1xf32> to vector<1x1xf32>
    %49 = vector.shape_cast %48 : vector<1x1xf32> to vector<1x1x1xf32>
    %50 = arith.addf %45, %49 : vector<1x1x1xf32>
    %c0_16 = arith.constant 0 : index
    %c0_17 = arith.constant 0 : index
    %c0_18 = arith.constant 0 : index
    %51 = vector.load %arg5[%c0_16, %c0_17, %c0_18] : memref<1x1x1xf32, #tpu.memory_space<vmem>>, vector<1x1x1xf32>
    tpu.vector_store %arg5[%c0_16, %c0_17, %c0_18], %50 {strides = array<i32>} : memref<1x1x1xf32, #tpu.memory_space<vmem>>, vector<1x1x1xf32>,
    %c0_19 = arith.constant 0 : index
    %c0_20 = arith.constant 0 : index
    %c0_21 = arith.constant 0 : index
    %52 = vector.load %arg6[%c0_19, %c0_20, %c0_21] : memref<1x1x1xf32, #tpu.memory_space<vmem>>, vector<1x1x1xf32>
    %cst_22 = arith.constant dense<0.000000e+00> : vector<1xf32>
    %53 = vector.multi_reduction <add>, %37, %cst_22 [0] : vector<64x1xf32> to vector<1xf32>
    %54 = vector.shape_cast %53 : vector<1xf32> to vector<1x1xf32>
    %55 = vector.shape_cast %54 : vector<1x1xf32> to vector<1x1x1xf32>
    %56 = arith.addf %52, %55 : vector<1x1x1xf32>
    %c0_23 = arith.constant 0 : index
    %c0_24 = arith.constant 0 : index
    %c0_25 = arith.constant 0 : index
    %57 = vector.load %arg6[%c0_23, %c0_24, %c0_25] : memref<1x1x1xf32, #tpu.memory_space<vmem>>, vector<1x1x1xf32>
    tpu.vector_store %arg6[%c0_23, %c0_24, %c0_25], %56 {strides = array<i32>} : memref<1x1x1xf32, #tpu.memory_space<vmem>>, vector<1x1x1xf32>,
    %58 = vector.broadcast %25 : vector<64x1xf32> to vector<64x8xf32>
    %59 = arith.divf %23, %58 : vector<64x8xf32>
    %60 = vector.broadcast %20 : vector<64x1xf32> to vector<64x8xf32>
    %61 = arith.cmpf oeq, %18, %60 : vector<64x8xf32>
    %c8_i32 = arith.constant 8 : i32
    %62 = vector.broadcast %c8_i32 : i32 to vector<64x8xi32>
    %63 = arith.select %61, %29, %62 : vector<64x8xi1>, vector<64x8xi32>
    %cst_26 = arith.constant dense<2147483647> : vector<64xi32>
    %64 = vector.multi_reduction <minsi>, %63, %cst_26 [1] : vector<64x8xi32> to vector<64xi32>
    %65 = vector.shape_cast %64 : vector<64xi32> to vector<64x1xi32>
    %66 = arith.cmpi eq, %65, %14 : vector<64x1xi32>
    %67 = arith.extui %66 : vector<64x1xi1> to vector<64x1xi32>
    %68 = arith.sitofp %67 : vector<64x1xi32> to vector<64x1xf32>
    %69 = vector.broadcast %68 : vector<64x1xf32> to vector<64x8xf32>
    %70 = arith.mulf %33, %69 : vector<64x8xf32>
    %cst_27 = arith.constant dense<0.000000e+00> : vector<8x8xf32>
    %71 = tpu.matmul %70, %59, %cst_27 {dimension_numbers = #tpu.dot_dimension_numbers<[0], [0], [1], [1], [0, 1, 1, 1], [], []>} : vector<64x8xf32>, vector<64x8xf32>, vector<8x8xf32> -> vector<8x8xf32>
    %c0_28 = arith.constant 0 : index
    %c0_29 = arith.constant 0 : index
    %c0_30 = arith.constant 0 : index
    %72 = vector.load %arg7[%c0_28, %c0_29, %c0_30] : memref<1x8x8xf32, #tpu.memory_space<vmem>>, vector<1x8x8xf32>
    %73 = vector.shape_cast %71 : vector<8x8xf32> to vector<1x8x8xf32>
    %74 = arith.addf %72, %73 : vector<1x8x8xf32>
    %c0_31 = arith.constant 0 : index
    %c0_32 = arith.constant 0 : index
    %c0_33 = arith.constant 0 : index
    %75 = vector.load %arg7[%c0_31, %c0_32, %c0_33] : memref<1x8x8xf32, #tpu.memory_space<vmem>>, vector<1x8x8xf32>
    tpu.vector_store %arg7[%c0_31, %c0_32, %c0_33], %74 {strides = array<i32>} : memref<1x8x8xf32, #tpu.memory_space<vmem>>, vector<1x8x8xf32>,
    %c0_34 = arith.constant 0 : index
    %c0_35 = arith.constant 0 : index
    %c0_36 = arith.constant 0 : index
    %76 = vector.load %arg8[%c0_34, %c0_35, %c0_36] : memref<1x1x8xf32, #tpu.memory_space<vmem>>, vector<1x1x8xf32>
    %cst_37 = arith.constant dense<0.000000e+00> : vector<8xf32>
    %77 = vector.multi_reduction <add>, %70, %cst_37 [0] : vector<64x8xf32> to vector<8xf32>
    %78 = vector.shape_cast %77 : vector<8xf32> to vector<1x8xf32>
    %79 = vector.shape_cast %78 : vector<1x8xf32> to vector<1x1x8xf32>
    %80 = arith.addf %76, %79 : vector<1x1x8xf32>
    %c0_38 = arith.constant 0 : index
    %c0_39 = arith.constant 0 : index
    %c0_40 = arith.constant 0 : index
    %81 = vector.load %arg8[%c0_38, %c0_39, %c0_40] : memref<1x1x8xf32, #tpu.memory_space<vmem>>, vector<1x1x8xf32>
    tpu.vector_store %arg8[%c0_38, %c0_39, %c0_40], %80 {strides = array<i32>} : memref<1x1x8xf32, #tpu.memory_space<vmem>>, vector<1x1x8xf32>,
    return
  }
  func.func @transform_0(%arg0: i32, %arg1: i32) -> (i32, i32) {
    %c4_i32 = arith.constant 4 : i32
    %0 = arith.muli %arg0, %c4_i32 : i32
    %1 = arith.addi %0, %arg1 : i32
    %c0_i32 = arith.constant 0 : i32
    %c0_i32_0 = arith.constant 0 : i32
    return %1, %c0_i32 : i32, i32
  }
  func.func @transform_1(%arg0: i32, %arg1: i32) -> (i32, i32) {
    %c4_i32 = arith.constant 4 : i32
    %0 = arith.muli %arg0, %c4_i32 : i32
    %1 = arith.addi %0, %arg1 : i32
    %c0_i32 = arith.constant 0 : i32
    %c0_i32_0 = arith.constant 0 : i32
    return %1, %c0_i32 : i32, i32
  }
  func.func @transform_2(%arg0: i32, %arg1: i32) -> (i32, i32) {
    %c0_i32 = arith.constant 0 : i32
    %c0_i32_0 = arith.constant 0 : i32
    %c0_i32_1 = arith.constant 0 : i32
    return %c0_i32, %c0_i32_0 : i32, i32
  }
  func.func @transform_3(%arg0: i32, %arg1: i32) -> (i32, i32, i32) {
    %c0_i32 = arith.constant 0 : i32
    %c0_i32_0 = arith.constant 0 : i32
    %c0_i32_1 = arith.constant 0 : i32
    return %arg0, %c0_i32, %c0_i32_0 : i32, i32, i32
  }
  func.func @transform_4(%arg0: i32, %arg1: i32) -> (i32, i32, i32) {
    %c0_i32 = arith.constant 0 : i32
    %c0_i32_0 = arith.constant 0 : i32
    %c0_i32_1 = arith.constant 0 : i32
    return %arg0, %c0_i32, %c0_i32_0 : i32, i32, i32
  }
  func.func @transform_5(%arg0: i32, %arg1: i32) -> (i32, i32, i32) {
    %c0_i32 = arith.constant 0 : i32
    %c0_i32_0 = arith.constant 0 : i32
    %c0_i32_1 = arith.constant 0 : i32
    return %arg0, %c0_i32, %c0_i32_0 : i32, i32, i32
  }
  func.func @transform_6(%arg0: i32, %arg1: i32) -> (i32, i32, i32) {
    %c0_i32 = arith.constant 0 : i32
    %c0_i32_0 = arith.constant 0 : i32
    %c0_i32_1 = arith.constant 0 : i32
    return %arg0, %c0_i32, %c0_i32_0 : i32, i32, i32
  }
}

</mosaic_0001>

<llo_original>
// kernel: tpu_custom_call.1
$region0: #{tpu_custom_call.1}
  #allocation0 [shape = 'u32[]', space=smem, size = 0x4, offset = 0x4, fixed_abs, tag = 'smem constant byte address 0x4 - core index']
  #allocation1 [shape = 'u32[144,128]{1,0:T(1,128)}', space=vmem, size = 0x12000, scoped, tag = 'internal scratch']
  %s0 = inlined_call_operand.vmem [shape: f32[200,8], index: 0, kind: input, shape index: {}]
  %s1 = inlined_call_operand.vmem [shape: s32[200,1], index: 1, kind: input, shape index: {}]
  %s2 = inlined_call_operand.vmem [shape: f32[8,8], index: 2, kind: input, shape index: {}]
  %s3 = inlined_call_operand.hbm [shape: f32[1,1,1], index: 3, kind: output, shape index: {0}]
  %s4 = inlined_call_operand.hbm [shape: f32[1,1,1], index: 4, kind: output, shape index: {1}]
  %s5 = inlined_call_operand.hbm [shape: f32[1,8,8], index: 5, kind: output, shape index: {2}]
  %s6 = inlined_call_operand.hbm [shape: f32[1,1,8], index: 6, kind: output, shape index: {3}]
  %7 = xla_tuple %s3, %s4, %s5, %s6
  %s8 = sld [smem:[#allocation0]]
  $region73: #{tpu_custom_call.1} parent=0
    _
  %s10 = ssub.s32 1, %s8
  %s11 = scalar_select 0, %s10, %s8
  $region1: #{tpu_custom_call.1} parent=0
    #allocation2 [shape = 'u8[512]{0}', space=vmem, size = 0x400, scoped, tag = 'output window, operand 0, single buffered']
    #allocation3 [shape = 's32[2]{0}', space=sflag, size = 0x8, scoped, tag = 'scoped memory for tpu_custom_call.1']
    #allocation4 [shape = 'u8[512]{0}', space=vmem, size = 0x400, scoped, tag = 'output window, operand 1, single buffered']
    #allocation5 [shape = 's32[1]{0}', space=sflag, size = 0x4, scoped, tag = 'scoped memory for tpu_custom_call.1']
    #allocation6 [shape = 'u8[4096]{0}', space=vmem, size = 0x1000, scoped, tag = 'output window, operand 2, single buffered']
    #allocation7 [shape = 'u8[512]{0}', space=vmem, size = 0x400, scoped, tag = 'output window, operand 3, single buffered']
    #allocation8 [shape = 's32[1]{0}', space=sflag, size = 0x4, scoped, tag = 'scoped memory for tpu_custom_call.1']
    %12 = vsyncpa [#allocation3], 0
    %13 = vsyncpa [#allocation5], 0
    %14 = vsyncpa [#allocation8], 0
    loop: start=0, step=1, limit=6
    $region2: #{tpu_custom_call.1} parent=1 // loop_pre_header
      _
    $region3: #{tpu_custom_call.1} parent=1 // loop_header
      %s16 = sphi 0, %s20
      %p17 = scmp.ge.s32.totalorder %s16, 6
      %s23 = sphi 0, %s35
      %s24 = sphi 0, %s31
      %s25 = sphi 0, %s23
      %s26 = sphi 0, %s24
      %s27 = sphi 0, %s25
      %s28 = sphi 0, %s26
      %s42 = sphi 0, %s44
      %s45 = sphi 0, %s42
      %s46 = sphi 0, %s45
      %s62 = sphi 0, %s46
      %s72 = sphi 0, %s74
      %s75 = sphi 0, %s72
      %s76 = sphi 0, %s75
      %s92 = sphi 0, %s76
      %s96 = sphi 0, %s96
      %s98 = sphi 0, %s96
      %s99 = sphi 0, %s98
      %s113 = sphi 0, %s99
      %s119 = sphi 0, %s121
      %s122 = sphi 0, %s119
      %s123 = sphi 0, %s122
      %s139 = sphi 0, %s123
      %s145 = sphi 0, %s147
      %s148 = sphi 0, %s145
      %s149 = sphi 0, %s148
      %s165 = sphi 0, %s149
      %s171 = sphi 0, %s173
      %s174 = sphi 0, %s171
      %s175 = sphi 0, %s174
      %s191 = sphi 0, %s175
      %s197 = sphi 0, %s199
      %s200 = sphi 0, %s197
      %s201 = sphi 0, %s200
      %s217 = sphi 0, %s201
    $region4: #{tpu_custom_call.1} parent=1 // loop_header_branch
      %19 = sbr.rel (%p17) target = $region8
    $region5: #{tpu_custom_call.1} parent=1 // loop_body
      %s21 = ssub.s32 %s16, 1
      %s22 = ssub.s32 %s16, 2
      %s29 = sadd.s32 1, %s24
      %p30 = scmp.ge.s32.totalorder %s29, 4
      %s31 = scalar_select %p30, 0, %s29
      %s32 = sadd.s32 1, %s23
      %s33 = scalar_select %p30, %s32, %s23
      %p34 = scmp.ge.s32.totalorder %s33, 1
      %s35 = scalar_select %p34, 0, %s33
      %s36 = smul.u32 %s23, 4
      %s37 = sadd.s32 %s36, %s24
      %s38 = smul.u32 %s35, 4
      %s39 = sadd.s32 %s38, %s31
      %s40 = ssub.s32 %s37, %s39
      %p41 = scmp.eq.s32.totalorder %s40, 0
      %s43 = sadd.s32 %s42, 1
      %s44 = scalar_select %p41, %s42, %s43
      %p47 = pneg %p41
      %p48 = scmp.eq.s32.totalorder %s16, 3
      %p49 = por %p47, %p48
      %p50 = scmp.ne.s32.totalorder %s42, %s45
      %p51 = scmp.eq.s32.totalorder %s16, 0
      %p52 = por %p50, %p51
      %p53 = scmp.ne.s32.totalorder %s42, %s45
      %p54 = scmp.eq.s32.totalorder %s21, 3
      %p55 = por %p53, %p54
      %p56 = scmp.ne.s32.totalorder %s45, %s46
      %p57 = scmp.eq.s32.totalorder %s21, 0
      %p58 = por %p56, %p57
      %p59 = scmp.ne.s32.totalorder %s45, %s46
      %p60 = scmp.eq.s32.totalorder %s22, 3
      %p61 = por %p59, %p60
      %p63 = scmp.ne.s32.totalorder %s46, %s62
      %p64 = scmp.eq.s32.totalorder %s22, 0
      %p65 = por %p63, %p64
      %s66 = smul.u32 %s23, 4
      %s67 = sadd.s32 %s66, %s24
      %s68 = smul.u32 %s35, 4
      %s69 = sadd.s32 %s68, %s31
      %s70 = ssub.s32 %s67, %s69
      %p71 = scmp.eq.s32.totalorder %s70, 0
      %s73 = sadd.s32 %s72, 1
      %s74 = scalar_select %p71, %s72, %s73
      %p77 = pneg %p71
      %p78 = scmp.eq.s32.totalorder %s16, 3
      %p79 = por %p77, %p78
      %p80 = scmp.ne.s32.totalorder %s72, %s75
      %p81 = scmp.eq.s32.totalorder %s16, 0
      %p82 = por %p80, %p81
      %p83 = scmp.ne.s32.totalorder %s72, %s75
      %p84 = scmp.eq.s32.totalorder %s21, 3
      %p85 = por %p83, %p84
      %p86 = scmp.ne.s32.totalorder %s75, %s76
      %p87 = scmp.eq.s32.totalorder %s21, 0
      %p88 = por %p86, %p87
      %p89 = scmp.ne.s32.totalorder %s75, %s76
      %p90 = scmp.eq.s32.totalorder %s22, 3
      %p91 = por %p89, %p90
      %p93 = scmp.ne.s32.totalorder %s76, %s92
      %p94 = scmp.eq.s32.totalorder %s22, 0
      %p95 = por %p93, %p94
      %s97 = sadd.s32 %s96, 1
      %p100 = scmp.eq.s32.totalorder %s16, 3
      %p101 = scmp.ne.s32.totalorder %s96, %s98
      %p102 = scmp.eq.s32.totalorder %s16, 0
      %p103 = por %p101, %p102
      %p104 = scmp.ne.s32.totalorder %s96, %s98
      %p105 = scmp.eq.s32.totalorder %s21, 3
      %p106 = por %p104, %p105
      %p107 = scmp.ne.s32.totalorder %s98, %s99
      %p108 = scmp.eq.s32.totalorder %s21, 0
      %p109 = por %p107, %p108
      %p110 = scmp.ne.s32.totalorder %s98, %s99
      %p111 = scmp.eq.s32.totalorder %s22, 3
      %p112 = por %p110, %p111
      %p114 = scmp.ne.s32.totalorder %s99, %s113
      %p115 = scmp.eq.s32.totalorder %s22, 0
      %p116 = por %p114, %p115
      %s117 = ssub.s32 %s23, %s35
      %p118 = scmp.eq.s32.totalorder %s117, 0
      %s120 = sadd.s32 %s119, 1
      %s121 = scalar_select %p118, %s119, %s120
      %p124 = pneg %p118
      %p125 = scmp.eq.s32.totalorder %s16, 3
      %p126 = por %p124, %p125
      %p127 = scmp.ne.s32.totalorder %s119, %s122
      %p128 = scmp.eq.s32.totalorder %s16, 0
      %p129 = por %p127, %p128
      %p130 = scmp.ne.s32.totalorder %s119, %s122
      %p131 = scmp.eq.s32.totalorder %s21, 3
      %p132 = por %p130, %p131
      %p133 = scmp.ne.s32.totalorder %s122, %s123
      %p134 = scmp.eq.s32.totalorder %s21, 0
      %p135 = por %p133, %p134
      %p136 = scmp.ne.s32.totalorder %s122, %s123
      %p137 = scmp.eq.s32.totalorder %s22, 3
      %p138 = por %p136, %p137
      %p140 = scmp.ne.s32.totalorder %s123, %s139
      %p141 = scmp.eq.s32.totalorder %s22, 0
      %p142 = por %p140, %p141
      %s143 = ssub.s32 %s23, %s35
      %p144 = scmp.eq.s32.totalorder %s143, 0
      %s146 = sadd.s32 %s145, 1
      %s147 = scalar_select %p144, %s145, %s146
      %p150 = pneg %p144
      %p151 = scmp.eq.s32.totalorder %s16, 3
      %p152 = por %p150, %p151
      %p153 = scmp.ne.s32.totalorder %s145, %s148
      %p154 = scmp.eq.s32.totalorder %s16, 0
      %p155 = por %p153, %p154
      %p156 = scmp.ne.s32.totalorder %s145, %s148
      %p157 = scmp.eq.s32.totalorder %s21, 3
      %p158 = por %p156, %p157
      %p159 = scmp.ne.s32.totalorder %s148, %s149
      %p160 = scmp.eq.s32.totalorder %s21, 0
      %p161 = por %p159, %p160
      %p162 = scmp.ne.s32.totalorder %s148, %s149
      %p163 = scmp.eq.s32.totalorder %s22, 3
      %p164 = por %p162, %p163
      %p166 = scmp.ne.s32.totalorder %s149, %s165
      %p167 = scmp.eq.s32.totalorder %s22, 0
      %p168 = por %p166, %p167
      %s169 = ssub.s32 %s23, %s35
      %p170 = scmp.eq.s32.totalorder %s169, 0
      %s172 = sadd.s32 %s171, 1
      %s173 = scalar_select %p170, %s171, %s172
      %p176 = pneg %p170
      %p177 = scmp.eq.s32.totalorder %s16, 3
      %p178 = por %p176, %p177
      %p179 = scmp.ne.s32.totalorder %s171, %s174
      %p180 = scmp.eq.s32.totalorder %s16, 0
      %p181 = por %p179, %p180
      %p182 = scmp.ne.s32.totalorder %s171, %s174
      %p183 = scmp.eq.s32.totalorder %s21, 3
      %p184 = por %p182, %p183
      %p185 = scmp.ne.s32.totalorder %s174, %s175
      %p186 = scmp.eq.s32.totalorder %s21, 0
      %p187 = por %p185, %p186
      %p188 = scmp.ne.s32.totalorder %s174, %s175
      %p189 = scmp.eq.s32.totalorder %s22, 3
      %p190 = por %p188, %p189
      %p192 = scmp.ne.s32.totalorder %s175, %s191
      %p193 = scmp.eq.s32.totalorder %s22, 0
      %p194 = por %p192, %p193
      %s195 = ssub.s32 %s23, %s35
      %p196 = scmp.eq.s32.totalorder %s195, 0
      %s198 = sadd.s32 %s197, 1
      %s199 = scalar_select %p196, %s197, %s198
      %p202 = pneg %p196
      %p203 = scmp.eq.s32.totalorder %s16, 3
      %p204 = por %p202, %p203
      %p205 = scmp.ne.s32.totalorder %s197, %s200
      %p206 = scmp.eq.s32.totalorder %s16, 0
      %p207 = por %p205, %p206
      %p208 = scmp.ne.s32.totalorder %s197, %s200
      %p209 = scmp.eq.s32.totalorder %s21, 3
      %p210 = por %p208, %p209
      %p211 = scmp.ne.s32.totalorder %s200, %s201
      %p212 = scmp.eq.s32.totalorder %s21, 0
      %p213 = por %p211, %p212
      %p214 = scmp.ne.s32.totalorder %s200, %s201
      %p215 = scmp.eq.s32.totalorder %s22, 3
      %p216 = por %p214, %p215
      %p218 = scmp.ne.s32.totalorder %s201, %s217
      %p219 = scmp.eq.s32.totalorder %s22, 0
      %p220 = por %p218, %p219
      %p221 = scmp.le.s32.totalorder 1, %s16
      %p222 = scmp.lt.s32.totalorder %s16, 5
      %p223 = pnand %p221, %p222
      %p224 = pneg %p223
      // Predicated region
      $region9: #{tpu_custom_call.1} parent=5 // pred_check
        _
      $region10: #{tpu_custom_call.1} parent=5 // pred_check_branch
        %226 = sbr.rel (%p223) target = $region12
      $region11: #{tpu_custom_call.1} parent=5 // pred_region
        %s227 = ssub.s32 %s16, 1
        // Predicated region
        $region13: #{tpu_custom_call.1} parent=11 // pred_check
          %p228 = pneg %p109
        $region14: #{tpu_custom_call.1} parent=11 // pred_check_branch
          %230 = sbr.rel (%p228) target = $region16
        $region15: #{tpu_custom_call.1} parent=11 // pred_region
          _
        $region16: #{tpu_custom_call.1} parent=11 // pred_fallthru
          _
      $region12: #{tpu_custom_call.1} parent=5 // pred_fallthru
        _
      %p231 = scmp.lt.s32.totalorder %s16, 4
      // Predicated region
      $region17: #{tpu_custom_call.1} parent=5 // pred_check
        %p232 = pneg %p231
      $region18: #{tpu_custom_call.1} parent=5 // pred_check_branch
        %234 = sbr.rel (%p232) target = $region20
      $region19: #{tpu_custom_call.1} parent=5 // pred_region
        // Predicated region
        $region21: #{tpu_custom_call.1} parent=19 // pred_check
          %p235 = pneg %p52
        $region22: #{tpu_custom_call.1} parent=19 // pred_check_branch
          %237 = sbr.rel (%p235) target = $region24
        $region23: #{tpu_custom_call.1} parent=19 // pred_region
          %s238 = smul.u32 %s23, 4
          %s239 = sadd.s32 %s238, %s24
          %s240 = smul.u32 8, %s239
          %s241 = ssub.s32 25, %s240
          %p242 = scmp.lt.s32.totalorder %s241, 8
          %s243 = scalar_select %p242, %s241, 8
          %s244 = smul.u32 128, %s243
          %p245 = scmp.lt.s32.totalorder %s240, 24
          %s246 = scalar_select %p245, %s240, 24
          %s247 = smul.addr %s246, 8
          %s248 = scalar_lea.vmem %s0, %s247
          %s249 = smul.u32 %s23, 4
          %s250 = sadd.s32 %s249, %s24
          %s251 = smul.u32 8, %s250
          %s252 = ssub.s32 25, %s251
          %p253 = scmp.lt.s32.totalorder %s252, 8
          %s254 = scalar_select %p253, %s252, 8
          %s255 = smul.u32 128, %s254
        $region24: #{tpu_custom_call.1} parent=19 // pred_fallthru
          _
        // Predicated region
        $region25: #{tpu_custom_call.1} parent=19 // pred_check
          %p256 = pneg %p82
        $region26: #{tpu_custom_call.1} parent=19 // pred_check_branch
          %258 = sbr.rel (%p256) target = $region28
        $region27: #{tpu_custom_call.1} parent=19 // pred_region
          %s259 = smul.u32 %s23, 4
          %s260 = sadd.s32 %s259, %s24
          %s261 = smul.u32 8, %s260
          %s262 = ssub.s32 25, %s261
          %p263 = scmp.lt.s32.totalorder %s262, 8
          %s264 = scalar_select %p263, %s262, 8
          %s265 = smul.u32 128, %s264
          %p266 = scmp.lt.s32.totalorder %s261, 24
          %s267 = scalar_select %p266, %s261, 24
          %s268 = smul.addr %s267, 8
          %s269 = scalar_lea.vmem %s1, %s268
          %s270 = smul.u32 %s23, 4
          %s271 = sadd.s32 %s270, %s24
          %s272 = smul.u32 8, %s271
          %s273 = ssub.s32 25, %s272
          %p274 = scmp.lt.s32.totalorder %s273, 8
          %s275 = scalar_select %p274, %s273, 8
          %s276 = smul.u32 128, %s275
        $region28: #{tpu_custom_call.1} parent=19 // pred_fallthru
          _
      $region20: #{tpu_custom_call.1} parent=5 // pred_fallthru
        _
      %p277 = scmp.le.s32.totalorder 1, %s16
      %p278 = scmp.lt.s32.totalorder %s16, 5
      %p279 = pnand %p277, %p278
      %p280 = pneg %p279
      // Predicated region
      $region29: #{tpu_custom_call.1} parent=5 // pred_check
        _
      $region30: #{tpu_custom_call.1} parent=5 // pred_check_branch
        %282 = sbr.rel (%p279) target = $region32
      $region31: #{tpu_custom_call.1} parent=5 // pred_region
        %s283 = ssub.s32 %s16, 1
        %s284 = smul.u32 %s25, 4
        %s285 = sadd.s32 %s284, %s26
        %s286 = smul.u32 8, %s285
        %s287 = ssub.s32 25, %s286
        %p288 = scmp.lt.s32.totalorder %s287, 8
        %s289 = scalar_select %p288, %s287, 8
        %s290 = smul.u32 128, %s289
        %p291 = scmp.lt.s32.totalorder %s286, 24
        %s292 = scalar_select %p291, %s286, 24
        %s293 = smul.addr %s292, 8
        %s294 = scalar_lea.vmem %s0, %s293
        %p295 = pneg %p58
        %p296 = pneg %p55
        %s297 = smul.u32 %s25, 4
        %s298 = sadd.s32 %s297, %s26
        %s299 = smul.u32 8, %s298
        %s300 = ssub.s32 25, %s299
        %p301 = scmp.lt.s32.totalorder %s300, 8
        %s302 = scalar_select %p301, %s300, 8
        %s303 = smul.u32 128, %s302
        %p304 = scmp.lt.s32.totalorder %s299, 24
        %s305 = scalar_select %p304, %s299, 24
        %s306 = smul.addr %s305, 8
        %s307 = scalar_lea.vmem %s1, %s306
        %p308 = pneg %p88
        %p309 = pneg %p85
        %p310 = pneg %p109
        %p311 = pneg %p106
        %p312 = pneg %p135
        %p313 = pneg %p132
        %p314 = pneg %p161
        %p315 = pneg %p158
        %p316 = pneg %p187
        %p317 = pneg %p184
        %p318 = pneg %p213
        %p319 = pneg %p210
        %s320 = smul.u32 %s25, 4
        %s321 = sadd.s32 %s320, %s26
        %s322 = smul.u32 8, %s321
        %s323 = ssub.s32 25, %s322
        %p324 = scmp.lt.s32.totalorder %s323, 8
        %s325 = scalar_select %p324, %s323, 8
        %s326 = smul.u32 128, %s325
        %p327 = scmp.lt.s32.totalorder %s322, 24
        %s328 = scalar_select %p327, %s322, 24
        %s329 = smul.addr %s328, 8
        %s330 = scalar_lea.vmem %s0, %s329
        %s331 = smul.u32 %s25, 4
        %s332 = sadd.s32 %s331, %s26
        %s333 = smul.u32 8, %s332
        %s334 = ssub.s32 25, %s333
        %p335 = scmp.lt.s32.totalorder %s334, 8
        %s336 = scalar_select %p335, %s334, 8
        %s337 = smul.u32 128, %s336
        %s338 = smul.u32 %s25, 4
        %s339 = sadd.s32 %s338, %s26
        %s340 = smul.u32 8, %s339
        %s341 = ssub.s32 25, %s340
        %p342 = scmp.lt.s32.totalorder %s341, 8
        %s343 = scalar_select %p342, %s341, 8
        %s344 = smul.u32 128, %s343
        %p345 = scmp.lt.s32.totalorder %s340, 24
        %s346 = scalar_select %p345, %s340, 24
        %s347 = smul.addr %s346, 8
        %s348 = scalar_lea.vmem %s1, %s347
        %s349 = smul.u32 %s25, 4
        %s350 = sadd.s32 %s349, %s26
        %s351 = smul.u32 8, %s350
        %s352 = ssub.s32 25, %s351
        %p353 = scmp.lt.s32.totalorder %s352, 8
        %s354 = scalar_select %p353, %s352, 8
        %s355 = smul.u32 128, %s354
        %p356 = scmp.eq.s32.totalorder %s26, 0
        // Predicated region
        $region33: #{tpu_custom_call.1} parent=31 // pred_check
          %p357 = pneg %p356
        $region34: #{tpu_custom_call.1} parent=31 // pred_check_branch
          %359 = sbr.rel (%p357) target = $region36
        $region35: #{tpu_custom_call.1} parent=31 // pred_region
          %vm360 = vcmask 0
          %361 = vst.msk [vmem:[#allocation2] sm:$0x1] %vm360, 0.0
          %362 = vst.msk [vmem:[#allocation4] sm:$0x1] %vm360, 0.0
          %vm363 = vcmask 64512
          %364 = vst.msk [vmem:[#allocation6] sm:$0xff] %vm363, 0.0
          %vm365 = vcmask 57344
          %366 = vst.msk [vmem:[#allocation7] sm:$0x1] %vm365, 0.0
        $region36: #{tpu_custom_call.1} parent=31 // pred_fallthru
          _
        %v367 = vld [vmem:[%s330] sm:$0xff]
        %v368 = vld [vmem:[%s330 + $0x8] sm:$0xff]
        %v369 = vld [vmem:[%s330 + $0x10] sm:$0xff]
        %v370 = vld [vmem:[%s330 + $0x18] sm:$0xff]
        %v371 = vld [vmem:[%s330 + $0x20] sm:$0xff]
        %v372 = vld [vmem:[%s330 + $0x28] sm:$0xff]
        %v373 = vld [vmem:[%s330 + $0x30] sm:$0xff]
        %v374 = vld [vmem:[%s330 + $0x38] sm:$0xff]
        %v375 = vld [vmem:[%s348] sm:$0xff]
        %v376 = vld [vmem:[%s348 + $0x8] sm:$0xff]
        %v377 = vld [vmem:[%s348 + $0x10] sm:$0xff]
        %v378 = vld [vmem:[%s348 + $0x18] sm:$0xff]
        %v379 = vld [vmem:[%s348 + $0x20] sm:$0xff]
        %v380 = vld [vmem:[%s348 + $0x28] sm:$0xff]
        %v381 = vld [vmem:[%s348 + $0x30] sm:$0xff]
        %v382 = vld [vmem:[%s348 + $0x38] sm:$0xff]
        %v383 = vlaneseq
        %v384 = vshrl.u32 %v383, 7
        %v385 = vadd.s32 %v384, 8
        %v386 = vadd.s32 %v384, 16
        %v387 = vadd.s32 %v384, 24
        %v388 = vadd.s32 %v384, 32
        %v389 = vadd.s32 %v384, 40
        %v390 = vadd.s32 %v384, 48
        %v391 = vadd.s32 %v384, 56
        %s392 = smul.u32 %s25, 4
        %s393 = sadd.s32 %s392, %s26
        %s394 = smul.u32 %s393, 64
        %v395 = vstv %s394
        %v396 = vadd.s32 %v395, %v384
        %v397 = vadd.s32 %v395, %v385
        %v398 = vadd.s32 %v395, %v386
        %v399 = vadd.s32 %v395, %v387
        %v400 = vadd.s32 %v395, %v388
        %v401 = vadd.s32 %v395, %v389
        %v402 = vadd.s32 %v395, %v390
        %v403 = vadd.s32 %v395, %v391
        %vm404 = vcmp.lt.s32.totalorder %v396, 200
        %vm405 = vcmp.lt.s32.totalorder %v397, 200
        %vm406 = vcmp.lt.s32.totalorder %v398, 200
        %vm407 = vcmp.lt.s32.totalorder %v399, 200
        %vm408 = vcmp.lt.s32.totalorder %v400, 200
        %vm409 = vcmp.lt.s32.totalorder %v401, 200
        %vm410 = vcmp.lt.s32.totalorder %v402, 200
        %vm411 = vcmp.lt.s32.totalorder %v403, 200
        %v412 = vsel %vm404, %v375, 4294967295
        %v413 = vsel %vm405, %v376, 4294967295
        %v414 = vsel %vm406, %v377, 4294967295
        %v415 = vsel %vm407, %v378, 4294967295
        %v416 = vsel %vm408, %v379, 4294967295
        %v417 = vsel %vm409, %v380, 4294967295
        %v418 = vsel %vm410, %v381, 4294967295
        %v419 = vsel %vm411, %v382, 4294967295
        %v420 = vsel %vm404, 1, 0
        %v421 = vsel %vm405, 1, 0
        %v422 = vsel %vm406, 1, 0
        %v423 = vsel %vm407, 1, 0
        %v424 = vsel %vm408, 1, 0
        %v425 = vsel %vm409, 1, 0
        %v426 = vsel %vm410, 1, 0
        %v427 = vsel %vm411, 1, 0
        %vm428 = vcmp.eq.s32.totalorder %v420, 1
        %vm429 = vcmp.eq.s32.totalorder %v421, 1
        %vm430 = vcmp.eq.s32.totalorder %v422, 1
        %vm431 = vcmp.eq.s32.totalorder %v423, 1
        %vm432 = vcmp.eq.s32.totalorder %v424, 1
        %vm433 = vcmp.eq.s32.totalorder %v425, 1
        %vm434 = vcmp.eq.s32.totalorder %v426, 1
        %vm435 = vcmp.eq.s32.totalorder %v427, 1
        %v436 = vsel %vm428, %v367, 0.0
        %v437 = vsel %vm429, %v368, 0.0
        %v438 = vsel %vm430, %v369, 0.0
        %v439 = vsel %vm431, %v370, 0.0
        %v440 = vsel %vm432, %v371, 0.0
        %v441 = vsel %vm433, %v372, 0.0
        %v442 = vsel %vm434, %v373, 0.0
        %v443 = vsel %vm435, %v374, 0.0
        %vm444 = vcmask 64512
        %v445 = vsel %vm444, %v436, -inf
        %446 = vmax.xlane.f32.xlu0 %v445
        %v447 = vpop.xlane.xlu0 %446
        %v448 = vsel %vm444, %v437, -inf
        %449 = vmax.xlane.f32.xlu0 %v448
        %v450 = vpop.xlane.xlu0 %449
        %v451 = vsel %vm444, %v438, -inf
        %452 = vmax.xlane.f32.xlu0 %v451
        %v453 = vpop.xlane.xlu0 %452
        %v454 = vsel %vm444, %v439, -inf
        %455 = vmax.xlane.f32.xlu0 %v454
        %v456 = vpop.xlane.xlu0 %455
        %v457 = vsel %vm444, %v440, -inf
        %458 = vmax.xlane.f32.xlu0 %v457
        %v459 = vpop.xlane.xlu0 %458
        %v460 = vsel %vm444, %v441, -inf
        %461 = vmax.xlane.f32.xlu0 %v460
        %v462 = vpop.xlane.xlu0 %461
        %v463 = vsel %vm444, %v442, -inf
        %464 = vmax.xlane.f32.xlu0 %v463
        %v465 = vpop.xlane.xlu0 %464
        %v466 = vsel %vm444, %v443, -inf
        %467 = vmax.xlane.f32.xlu0 %v466
        %v468 = vpop.xlane.xlu0 %467
        %v469 = vsub.f32 %v436, %v447
        %v470 = vsub.f32 %v437, %v450
        %v471 = vsub.f32 %v438, %v453
        %v472 = vsub.f32 %v439, %v456
        %v473 = vsub.f32 %v440, %v459
        %v474 = vsub.f32 %v441, %v462
        %v475 = vsub.f32 %v442, %v465
        %v476 = vsub.f32 %v443, %v468
        %v477 = vmul.f32 %v469, 1.442695
        %v478 = vpow.pop %v477
        %v479 = vmul.f32 %v470, 1.442695
        %v480 = vpow.pop %v479
        %v481 = vmul.f32 %v471, 1.442695
        %v482 = vpow.pop %v481
        %v483 = vmul.f32 %v472, 1.442695
        %v484 = vpow.pop %v483
        %v485 = vmul.f32 %v473, 1.442695
        %v486 = vpow.pop %v485
        %v487 = vmul.f32 %v474, 1.442695
        %v488 = vpow.pop %v487
        %v489 = vmul.f32 %v475, 1.442695
        %v490 = vpow.pop %v489
        %v491 = vmul.f32 %v476, 1.442695
        %v492 = vpow.pop %v491
        %v493 = vsel %vm444, %v478, 0.0
        %494 = vadd.xlane.f32.xlu0 %v493
        %v495 = vpop.xlane.xlu0 %494
        %v496 = vsel %vm444, %v480, 0.0
        %497 = vadd.xlane.f32.xlu0 %v496
        %v498 = vpop.xlane.xlu0 %497
        %v499 = vsel %vm444, %v482, 0.0
        %500 = vadd.xlane.f32.xlu0 %v499
        %v501 = vpop.xlane.xlu0 %500
        %v502 = vsel %vm444, %v484, 0.0
        %503 = vadd.xlane.f32.xlu0 %v502
        %v504 = vpop.xlane.xlu0 %503
        %v505 = vsel %vm444, %v486, 0.0
        %506 = vadd.xlane.f32.xlu0 %v505
        %v507 = vpop.xlane.xlu0 %506
        %v508 = vsel %vm444, %v488, 0.0
        %509 = vadd.xlane.f32.xlu0 %v508
        %v510 = vpop.xlane.xlu0 %509
        %v511 = vsel %vm444, %v490, 0.0
        %512 = vadd.xlane.f32.xlu0 %v511
        %v513 = vpop.xlane.xlu0 %512
        %v514 = vsel %vm444, %v492, 0.0
        %515 = vadd.xlane.f32.xlu0 %v514
        %v516 = vpop.xlane.xlu0 %515
        %v517 = vlog2.pop %v495
        %v518 = vmul.f32 %v517, 0.6931472
        %v519 = vlog2.pop %v498
        %v520 = vmul.f32 %v519, 0.6931472
        %v521 = vlog2.pop %v501
        %v522 = vmul.f32 %v521, 0.6931472
        %v523 = vlog2.pop %v504
        %v524 = vmul.f32 %v523, 0.6931472
        %v525 = vlog2.pop %v507
        %v526 = vmul.f32 %v525, 0.6931472
        %v527 = vlog2.pop %v510
        %v528 = vmul.f32 %v527, 0.6931472
        %v529 = vlog2.pop %v513
        %v530 = vmul.f32 %v529, 0.6931472
        %v531 = vlog2.pop %v516
        %v532 = vmul.f32 %v531, 0.6931472
        %v533 = vsub.f32 %v469, %v518
        %v534 = vsub.f32 %v470, %v520
        %v535 = vsub.f32 %v471, %v522
        %v536 = vsub.f32 %v472, %v524
        %v537 = vsub.f32 %v473, %v526
        %v538 = vsub.f32 %v474, %v528
        %v539 = vsub.f32 %v475, %v530
        %v540 = vsub.f32 %v476, %v532
        %v541 = vlaneseq
        %v542 = vand.u32 %v541, 127
        %543 = vset.pattern.permute.xlu0 0
        %544 = vperm.xlu0 %543, %v412
        %v545 = vpop.permute.xlu0 %544
        %546 = vset.pattern.permute.xlu0 0
        %547 = vperm.xlu0 %546, %v413
        %v548 = vpop.permute.xlu0 %547
        %549 = vset.pattern.permute.xlu0 0
        %550 = vperm.xlu0 %549, %v414
        %v551 = vpop.permute.xlu0 %550
        %552 = vset.pattern.permute.xlu0 0
        %553 = vperm.xlu0 %552, %v415
        %v554 = vpop.permute.xlu0 %553
        %555 = vset.pattern.permute.xlu0 0
        %556 = vperm.xlu0 %555, %v416
        %v557 = vpop.permute.xlu0 %556
        %558 = vset.pattern.permute.xlu0 0
        %559 = vperm.xlu0 %558, %v417
        %v560 = vpop.permute.xlu0 %559
        %561 = vset.pattern.permute.xlu0 0
        %562 = vperm.xlu0 %561, %v418
        %v563 = vpop.permute.xlu0 %562
        %564 = vset.pattern.permute.xlu0 0
        %565 = vperm.xlu0 %564, %v419
        %v566 = vpop.permute.xlu0 %565
        %vm567 = vcmp.eq.s32.totalorder %v542, %v545
        %vm568 = vcmp.eq.s32.totalorder %v542, %v548
        %vm569 = vcmp.eq.s32.totalorder %v542, %v551
        %vm570 = vcmp.eq.s32.totalorder %v542, %v554
        %vm571 = vcmp.eq.s32.totalorder %v542, %v557
        %vm572 = vcmp.eq.s32.totalorder %v542, %v560
        %vm573 = vcmp.eq.s32.totalorder %v542, %v563
        %vm574 = vcmp.eq.s32.totalorder %v542, %v566
        %v575 = vsel %vm567, 1, 0
        %v576 = vsel %vm568, 1, 0
        %v577 = vsel %vm569, 1, 0
        %v578 = vsel %vm570, 1, 0
        %v579 = vsel %vm571, 1, 0
        %v580 = vsel %vm572, 1, 0
        %v581 = vsel %vm573, 1, 0
        %v582 = vsel %vm574, 1, 0
        %v583 = vcvt.s32.f32 %v575
        %v584 = vcvt.s32.f32 %v576
        %v585 = vcvt.s32.f32 %v577
        %v586 = vcvt.s32.f32 %v578
        %v587 = vcvt.s32.f32 %v579
        %v588 = vcvt.s32.f32 %v580
        %v589 = vcvt.s32.f32 %v581
        %v590 = vcvt.s32.f32 %v582
        %vm591 = vcmp.ne.s32.totalorder %v412, 4294967295
        %vm592 = vcmp.ne.s32.totalorder %v413, 4294967295
        %vm593 = vcmp.ne.s32.totalorder %v414, 4294967295
        %vm594 = vcmp.ne.s32.totalorder %v415, 4294967295
        %vm595 = vcmp.ne.s32.totalorder %v416, 4294967295
        %vm596 = vcmp.ne.s32.totalorder %v417, 4294967295
        %vm597 = vcmp.ne.s32.totalorder %v418, 4294967295
        %vm598 = vcmp.ne.s32.totalorder %v419, 4294967295
        %v599 = vsel %vm591, 1, 0
        %v600 = vsel %vm592, 1, 0
        %v601 = vsel %vm593, 1, 0
        %v602 = vsel %vm594, 1, 0
        %v603 = vsel %vm595, 1, 0
        %v604 = vsel %vm596, 1, 0
        %v605 = vsel %vm597, 1, 0
        %v606 = vsel %vm598, 1, 0
        %v607 = vcvt.s32.f32 %v599
        %v608 = vcvt.s32.f32 %v600
        %v609 = vcvt.s32.f32 %v601
        %v610 = vcvt.s32.f32 %v602
        %v611 = vcvt.s32.f32 %v603
        %v612 = vcvt.s32.f32 %v604
        %v613 = vcvt.s32.f32 %v605
        %v614 = vcvt.s32.f32 %v606
        %v615 = vld [vmem:[%s2] sm:$0xff]
        %v617 = vsel %vm444, %v583, 0
        %v620 = vsel %vm444, %v584, 0
        %v623 = vsel %vm444, %v585, 0
        %v626 = vsel %vm444, %v586, 0
        %v629 = vsel %vm444, %v587, 0
        %v632 = vsel %vm444, %v588, 0
        %v635 = vsel %vm444, %v589, 0
        %v638 = vsel %vm444, %v590, 0
        %640 = vmatprep.subr.mxu0 0.0
        %641 = vmatpush1.msra.mxu0 %v615
        %642 = vmatprep.subr.mxu0 0.0
        %643 = vmatpush1.msra.mxu0 0.0
        %644 = vmatprep.subr.mxu0 0.0
        %645 = vmatpush1.msra.mxu0 0.0
        %646 = vmatprep.subr.mxu0 0.0
        %647 = vmatpush1.msra.mxu0 0.0
        %648 = vmatprep.subr.mxu0 0.0
        %649 = vmatpush1.msra.mxu0 0.0
        %650 = vmatprep.subr.mxu0 0.0
        %651 = vmatpush1.msra.mxu0 0.0
        %652 = vmatprep.subr.mxu0 0.0
        %653 = vmatpush1.msra.mxu0 0.0
        %654 = vmatprep.subr.mxu0 0.0
        %655 = vmatpush1.msra.mxu0 0.0
        %656 = vmatprep.subr.mxu0 0.0
        %657 = vmatpush1.msra.mxu0 0.0
        %658 = vmatprep.subr.mxu0 0.0
        %659 = vmatpush1.msra.mxu0 0.0
        %660 = vmatprep.subr.mxu0 0.0
        %661 = vmatpush1.msra.mxu0 0.0
        %662 = vmatprep.subr.mxu0 0.0
        %663 = vmatpush1.msra.mxu0 0.0
        %664 = vmatprep.subr.mxu0 0.0
        %665 = vmatpush1.msra.mxu0 0.0
        %666 = vmatprep.subr.mxu0 0.0
        %667 = vmatpush1.msra.mxu0 0.0
        %668 = vmatprep.subr.mxu0 0.0
        %669 = vmatpush1.msra.mxu0 0.0
        %670 = vmatprep.subr.mxu0 0.0
        %671 = vmatpush1.msra.mxu0 0.0
        %672 = vmatprep.subr.mxu0 0.0
        %673 = vmatpush1.msra.mxu0 0.0
        %674 = vmatprep.subr.mxu0 0.0
        %675 = vmatpush1.msra.mxu0 0.0
        %676 = vmatprep.subr.mxu0 0.0
        %677 = vmatpush1.msra.mxu0 0.0
        %678 = vmatprep.subr.mxu0 0.0
        %679 = vmatpush1.msra.mxu0 0.0
        %680 = vmatprep.subr.mxu0 0.0
        %681 = vmatpush1.msra.mxu0 0.0
        %682 = vmatprep.subr.mxu0 0.0
        %683 = vmatpush1.msra.mxu0 0.0
        %684 = vmatprep.subr.mxu0 0.0
        %685 = vmatpush1.msra.mxu0 0.0
        %686 = vmatprep.subr.mxu0 0.0
        %687 = vmatpush1.msra.mxu0 0.0
        %688 = vmatprep.subr.mxu0 0.0
        %689 = vmatpush1.msra.mxu0 0.0
        %690 = vmatprep.subr.mxu0 0.0
        %691 = vmatpush1.msra.mxu0 0.0
        %692 = vmatprep.subr.mxu0 0.0
        %693 = vmatpush1.msra.mxu0 0.0
        %694 = vmatprep.subr.mxu0 0.0
        %695 = vmatpush1.msra.mxu0 0.0
        %696 = vmatprep.subr.mxu0 0.0
        %697 = vmatpush1.msra.mxu0 0.0
        %698 = vmatprep.subr.mxu0 0.0
        %699 = vmatpush1.msra.mxu0 0.0
        %700 = vmatprep.subr.mxu0 0.0
        %701 = vmatpush1.msra.mxu0 0.0
        %702 = vmatprep.subr.mxu0 0.0
        %703 = vmatpush1.msra.mxu0 0.0
        %704 = vmatprep.mubr.f32.mxu0 0.0
        %705 = vmatmul.mubr.f32.gmra.mrb[0].mxu0 %v617
        %v706 = vpop.f32.mrb[0].mxu0
        %v707 = vadd.f32 0.0, %v706
        %v708 = vpop.f32.mrb[0].mxu0
        %709 = vmatprep.mubr.f32.mxu0 0.0
        %710 = vmatmul.mubr.f32.gmra.mrb[0].mxu0 %v620
        %v711 = vpop.f32.mrb[0].mxu0
        %v712 = vadd.f32 0.0, %v711
        %v713 = vpop.f32.mrb[0].mxu0
        %714 = vmatprep.mubr.f32.mxu0 0.0
        %715 = vmatmul.mubr.f32.gmra.mrb[0].mxu0 %v623
        %v716 = vpop.f32.mrb[0].mxu0
        %v717 = vadd.f32 0.0, %v716
        %v718 = vpop.f32.mrb[0].mxu0
        %719 = vmatprep.mubr.f32.mxu0 0.0
        %720 = vmatmul.mubr.f32.gmra.mrb[0].mxu0 %v626
        %v721 = vpop.f32.mrb[0].mxu0
        %v722 = vadd.f32 0.0, %v721
        %v723 = vpop.f32.mrb[0].mxu0
        %724 = vmatprep.mubr.f32.mxu0 0.0
        %725 = vmatmul.mubr.f32.gmra.mrb[0].mxu0 %v629
        %v726 = vpop.f32.mrb[0].mxu0
        %v727 = vadd.f32 0.0, %v726
        %v728 = vpop.f32.mrb[0].mxu0
        %729 = vmatprep.mubr.f32.mxu0 0.0
        %730 = vmatmul.mubr.f32.gmra.mrb[0].mxu0 %v632
        %v731 = vpop.f32.mrb[0].mxu0
        %v732 = vadd.f32 0.0, %v731
        %v733 = vpop.f32.mrb[0].mxu0
        %734 = vmatprep.mubr.f32.mxu0 0.0
        %735 = vmatmul.mubr.f32.gmra.mrb[0].mxu0 %v635
        %v736 = vpop.f32.mrb[0].mxu0
        %v737 = vadd.f32 0.0, %v736
        %v738 = vpop.f32.mrb[0].mxu0
        %739 = vmatprep.mubr.f32.mxu0 0.0
        %740 = vmatmul.mubr.f32.gmra.mrb[0].mxu0 %v638
        %v741 = vpop.f32.mrb[0].mxu0
        %v742 = vadd.f32 0.0, %v741
        %v743 = vpop.f32.mrb[0].mxu0
        %744 = vdwg.mxu0
        %v745 = vmul.f32 %v707, %v533
        %v746 = vmul.f32 %v712, %v534
        %v747 = vmul.f32 %v717, %v535
        %v748 = vmul.f32 %v722, %v536
        %v749 = vmul.f32 %v727, %v537
        %v750 = vmul.f32 %v732, %v538
        %v751 = vmul.f32 %v737, %v539
        %v752 = vmul.f32 %v742, %v540
        %v753 = vsel %vm444, %v745, 0.0
        %754 = vadd.xlane.f32.xlu0 %v753
        %v755 = vpop.xlane.xlu0 %754
        %v756 = vsel %vm444, %v746, 0.0
        %757 = vadd.xlane.f32.xlu0 %v756
        %v758 = vpop.xlane.xlu0 %757
        %v759 = vsel %vm444, %v747, 0.0
        %760 = vadd.xlane.f32.xlu0 %v759
        %v761 = vpop.xlane.xlu0 %760
        %v762 = vsel %vm444, %v748, 0.0
        %763 = vadd.xlane.f32.xlu0 %v762
        %v764 = vpop.xlane.xlu0 %763
        %v765 = vsel %vm444, %v749, 0.0
        %766 = vadd.xlane.f32.xlu0 %v765
        %v767 = vpop.xlane.xlu0 %766
        %v768 = vsel %vm444, %v750, 0.0
        %769 = vadd.xlane.f32.xlu0 %v768
        %v770 = vpop.xlane.xlu0 %769
        %v771 = vsel %vm444, %v751, 0.0
        %772 = vadd.xlane.f32.xlu0 %v771
        %v773 = vpop.xlane.xlu0 %772
        %v774 = vsel %vm444, %v752, 0.0
        %775 = vadd.xlane.f32.xlu0 %v774
        %v776 = vpop.xlane.xlu0 %775
        %v777 = vsub.f32 0.0, %v755
        %v778 = vsub.f32 0.0, %v758
        %v779 = vsub.f32 0.0, %v761
        %v780 = vsub.f32 0.0, %v764
        %v781 = vsub.f32 0.0, %v767
        %v782 = vsub.f32 0.0, %v770
        %v783 = vsub.f32 0.0, %v773
        %v784 = vsub.f32 0.0, %v776
        %v785 = vld [vmem:[#allocation2] sm:$0x1]
        %v786 = vmul.f32 %v777, %v607
        %v787 = vmul.f32 %v778, %v608
        %v788 = vmul.f32 %v779, %v609
        %v789 = vmul.f32 %v780, %v610
        %v790 = vmul.f32 %v781, %v611
        %v791 = vmul.f32 %v782, %v612
        %v792 = vmul.f32 %v783, %v613
        %v793 = vmul.f32 %v784, %v614
        %vm794 = vcmask 7168
        %v795 = vsel %vm794, %v786, 0.0
        %v796 = vsel %vm794, %v787, 0.0
        %v797 = vadd.f32 %v795, %v796
        %v798 = vsel %vm794, %v788, 0.0
        %v799 = vadd.f32 %v797, %v798
        %v800 = vsel %vm794, %v789, 0.0
        %v801 = vadd.f32 %v799, %v800
        %v802 = vsel %vm794, %v790, 0.0
        %v803 = vadd.f32 %v801, %v802
        %v804 = vsel %vm794, %v791, 0.0
        %v805 = vadd.f32 %v803, %v804
        %v806 = vsel %vm794, %v792, 0.0
        %v807 = vadd.f32 %v805, %v806
        %v808 = vsel %vm794, %v793, 0.0
        %v809 = vadd.f32 %v807, %v808
        %v810 = vrot.slane %v809, 4
        %v811 = vadd.f32 %v809, %v810
        %v812 = vrot.slane %v811, 2
        %v813 = vadd.f32 %v811, %v812
        %v814 = vrot.slane %v813, 1
        %v815 = vadd.f32 %v813, %v814
        %v816 = vadd.f32 %v785, %v815
        %vm817 = vcmask 0
        %818 = vst.msk [vmem:[#allocation2] sm:$0x1] %vm817, %v816
        %v819 = vld [vmem:[#allocation4] sm:$0x1]
        %v820 = vsel %vm794, %v607, 0.0
        %v821 = vsel %vm794, %v608, 0.0
        %v822 = vadd.f32 %v820, %v821
        %v823 = vsel %vm794, %v609, 0.0
        %v824 = vadd.f32 %v822, %v823
        %v825 = vsel %vm794, %v610, 0.0
        %v826 = vadd.f32 %v824, %v825
        %v827 = vsel %vm794, %v611, 0.0
        %v828 = vadd.f32 %v826, %v827
        %v829 = vsel %vm794, %v612, 0.0
        %v830 = vadd.f32 %v828, %v829
        %v831 = vsel %vm794, %v613, 0.0
        %v832 = vadd.f32 %v830, %v831
        %v833 = vsel %vm794, %v614, 0.0
        %v834 = vadd.f32 %v832, %v833
        %v835 = vrot.slane %v834, 4
        %v836 = vadd.f32 %v834, %v835
        %v837 = vrot.slane %v836, 2
        %v838 = vadd.f32 %v836, %v837
        %v839 = vrot.slane %v838, 1
        %v840 = vadd.f32 %v838, %v839
        %v841 = vadd.f32 %v819, %v840
        %842 = vst.msk [vmem:[#allocation4] sm:$0x1] %vm817, %v841
        %v843 = vrcp.pop %v495
        %v844 = vmul.f32 %v478, %v843
        %v845 = vrcp.pop %v498
        %v846 = vmul.f32 %v480, %v845
        %v847 = vrcp.pop %v501
        %v848 = vmul.f32 %v482, %v847
        %v849 = vrcp.pop %v504
        %v850 = vmul.f32 %v484, %v849
        %v851 = vrcp.pop %v507
        %v852 = vmul.f32 %v486, %v851
        %v853 = vrcp.pop %v510
        %v854 = vmul.f32 %v488, %v853
        %v855 = vrcp.pop %v513
        %v856 = vmul.f32 %v490, %v855
        %v857 = vrcp.pop %v516
        %v858 = vmul.f32 %v492, %v857
        %vm859 = vcmp.eq.f32.partialorder %v436, %v447
        %vm860 = vcmp.eq.f32.partialorder %v437, %v450
        %vm861 = vcmp.eq.f32.partialorder %v438, %v453
        %vm862 = vcmp.eq.f32.partialorder %v439, %v456
        %vm863 = vcmp.eq.f32.partialorder %v440, %v459
        %vm864 = vcmp.eq.f32.partialorder %v441, %v462
        %vm865 = vcmp.eq.f32.partialorder %v442, %v465
        %vm866 = vcmp.eq.f32.partialorder %v443, %v468
        %v867 = vsel %vm859, %v542, 8
        %v868 = vsel %vm860, %v542, 8
        %v869 = vsel %vm861, %v542, 8
        %v870 = vsel %vm862, %v542, 8
        %v871 = vsel %vm863, %v542, 8
        %v872 = vsel %vm864, %v542, 8
        %v873 = vsel %vm865, %v542, 8
        %v874 = vsel %vm866, %v542, 8
        %v875 = vsel %vm444, %v867, 2147483647
        %v876 = vand.u32 %v875, 65535
        %v877 = vshra.s32 %v875, 16
        %v878 = vcvt.s32.f32 %v876
        %v879 = vcvt.s32.f32 %v877
        %880 = vmin.xlane.f32.xlu0 %v879
        %v881 = vpop.xlane.xlu0 %880
        %vm882 = vcmp.eq.f32.partialorder %v879, %v881
        %v883 = vsel %vm882, %v878, inf
        %884 = vmin.xlane.f32.xlu0 %v883
        %v885 = vpop.xlane.xlu0 %884
        %v886 = vcvt.f32.s32 %v885
        %v887 = vcvt.f32.s32 %v881
        %v888 = vshll.u32 %v887, 16
        %v889 = vadd.s32 %v888, %v886
        %v890 = vsel %vm444, %v868, 2147483647
        %v891 = vand.u32 %v890, 65535
        %v892 = vshra.s32 %v890, 16
        %v893 = vcvt.s32.f32 %v891
        %v894 = vcvt.s32.f32 %v892
        %895 = vmin.xlane.f32.xlu0 %v894
        %v896 = vpop.xlane.xlu0 %895
        %vm897 = vcmp.eq.f32.partialorder %v894, %v896
        %v898 = vsel %vm897, %v893, inf
        %899 = vmin.xlane.f32.xlu0 %v898
        %v900 = vpop.xlane.xlu0 %899
        %v901 = vcvt.f32.s32 %v900
        %v902 = vcvt.f32.s32 %v896
        %v903 = vshll.u32 %v902, 16
        %v904 = vadd.s32 %v903, %v901
        %v905 = vsel %vm444, %v869, 2147483647
        %v906 = vand.u32 %v905, 65535
        %v907 = vshra.s32 %v905, 16
        %v908 = vcvt.s32.f32 %v906
        %v909 = vcvt.s32.f32 %v907
        %910 = vmin.xlane.f32.xlu0 %v909
        %v911 = vpop.xlane.xlu0 %910
        %vm912 = vcmp.eq.f32.partialorder %v909, %v911
        %v913 = vsel %vm912, %v908, inf
        %914 = vmin.xlane.f32.xlu0 %v913
        %v915 = vpop.xlane.xlu0 %914
        %v916 = vcvt.f32.s32 %v915
        %v917 = vcvt.f32.s32 %v911
        %v918 = vshll.u32 %v917, 16
        %v919 = vadd.s32 %v918, %v916
        %v920 = vsel %vm444, %v870, 2147483647
        %v921 = vand.u32 %v920, 65535
        %v922 = vshra.s32 %v920, 16
        %v923 = vcvt.s32.f32 %v921
        %v924 = vcvt.s32.f32 %v922
        %925 = vmin.xlane.f32.xlu0 %v924
        %v926 = vpop.xlane.xlu0 %925
        %vm927 = vcmp.eq.f32.partialorder %v924, %v926
        %v928 = vsel %vm927, %v923, inf
        %929 = vmin.xlane.f32.xlu0 %v928
        %v930 = vpop.xlane.xlu0 %929
        %v931 = vcvt.f32.s32 %v930
        %v932 = vcvt.f32.s32 %v926
        %v933 = vshll.u32 %v932, 16
        %v934 = vadd.s32 %v933, %v931
        %v935 = vsel %vm444, %v871, 2147483647
        %v936 = vand.u32 %v935, 65535
        %v937 = vshra.s32 %v935, 16
        %v938 = vcvt.s32.f32 %v936
        %v939 = vcvt.s32.f32 %v937
        %940 = vmin.xlane.f32.xlu0 %v939
        %v941 = vpop.xlane.xlu0 %940
        %vm942 = vcmp.eq.f32.partialorder %v939, %v941
        %v943 = vsel %vm942, %v938, inf
        %944 = vmin.xlane.f32.xlu0 %v943
        %v945 = vpop.xlane.xlu0 %944
        %v946 = vcvt.f32.s32 %v945
        %v947 = vcvt.f32.s32 %v941
        %v948 = vshll.u32 %v947, 16
        %v949 = vadd.s32 %v948, %v946
        %v950 = vsel %vm444, %v872, 2147483647
        %v951 = vand.u32 %v950, 65535
        %v952 = vshra.s32 %v950, 16
        %v953 = vcvt.s32.f32 %v951
        %v954 = vcvt.s32.f32 %v952
        %955 = vmin.xlane.f32.xlu0 %v954
        %v956 = vpop.xlane.xlu0 %955
        %vm957 = vcmp.eq.f32.partialorder %v954, %v956
        %v958 = vsel %vm957, %v953, inf
        %959 = vmin.xlane.f32.xlu0 %v958
        %v960 = vpop.xlane.xlu0 %959
        %v961 = vcvt.f32.s32 %v960
        %v962 = vcvt.f32.s32 %v956
        %v963 = vshll.u32 %v962, 16
        %v964 = vadd.s32 %v963, %v961
        %v965 = vsel %vm444, %v873, 2147483647
        %v966 = vand.u32 %v965, 65535
        %v967 = vshra.s32 %v965, 16
        %v968 = vcvt.s32.f32 %v966
        %v969 = vcvt.s32.f32 %v967
        %970 = vmin.xlane.f32.xlu0 %v969
        %v971 = vpop.xlane.xlu0 %970
        %vm972 = vcmp.eq.f32.partialorder %v969, %v971
        %v973 = vsel %vm972, %v968, inf
        %974 = vmin.xlane.f32.xlu0 %v973
        %v975 = vpop.xlane.xlu0 %974
        %v976 = vcvt.f32.s32 %v975
        %v977 = vcvt.f32.s32 %v971
        %v978 = vshll.u32 %v977, 16
        %v979 = vadd.s32 %v978, %v976
        %v980 = vsel %vm444, %v874, 2147483647
        %v981 = vand.u32 %v980, 65535
        %v982 = vshra.s32 %v980, 16
        %v983 = vcvt.s32.f32 %v981
        %v984 = vcvt.s32.f32 %v982
        %985 = vmin.xlane.f32.xlu0 %v984
        %v986 = vpop.xlane.xlu0 %985
        %vm987 = vcmp.eq.f32.partialorder %v984, %v986
        %v988 = vsel %vm987, %v983, inf
        %989 = vmin.xlane.f32.xlu0 %v988
        %v990 = vpop.xlane.xlu0 %989
        %v991 = vcvt.f32.s32 %v990
        %v992 = vcvt.f32.s32 %v986
        %v993 = vshll.u32 %v992, 16
        %v994 = vadd.s32 %v993, %v991
        %vm995 = vcmp.eq.s32.totalorder %v889, %v412
        %vm996 = vcmp.eq.s32.totalorder %v904, %v413
        %vm997 = vcmp.eq.s32.totalorder %v919, %v414
        %vm998 = vcmp.eq.s32.totalorder %v934, %v415
        %vm999 = vcmp.eq.s32.totalorder %v949, %v416
        %vm1000 = vcmp.eq.s32.totalorder %v964, %v417
        %vm1001 = vcmp.eq.s32.totalorder %v979, %v418
        %vm1002 = vcmp.eq.s32.totalorder %v994, %v419
        %v1003 = vsel %vm995, 1, 0
        %v1004 = vsel %vm996, 1, 0
        %v1005 = vsel %vm997, 1, 0
        %v1006 = vsel %vm998, 1, 0
        %v1007 = vsel %vm999, 1, 0
        %v1008 = vsel %vm1000, 1, 0
        %v1009 = vsel %vm1001, 1, 0
        %v1010 = vsel %vm1002, 1, 0
        %v1011 = vcvt.s32.f32 %v1003
        %v1012 = vcvt.s32.f32 %v1004
        %v1013 = vcvt.s32.f32 %v1005
        %v1014 = vcvt.s32.f32 %v1006
        %v1015 = vcvt.s32.f32 %v1007
        %v1016 = vcvt.s32.f32 %v1008
        %v1017 = vcvt.s32.f32 %v1009
        %v1018 = vcvt.s32.f32 %v1010
        %1020 = vset.pattern.permute.xlu0 0
        %1021 = vperm.xlu0 %1020, %v1011
        %v1022 = vpop.permute.xlu0 %1021
        %1025 = vset.pattern.permute.xlu0 0
        %1026 = vperm.xlu0 %1025, %v1012
        %v1027 = vpop.permute.xlu0 %1026
        %1030 = vset.pattern.permute.xlu0 0
        %1031 = vperm.xlu0 %1030, %v1013
        %v1032 = vpop.permute.xlu0 %1031
        %1035 = vset.pattern.permute.xlu0 0
        %1036 = vperm.xlu0 %1035, %v1014
        %v1037 = vpop.permute.xlu0 %1036
        %1040 = vset.pattern.permute.xlu0 0
        %1041 = vperm.xlu0 %1040, %v1015
        %v1042 = vpop.permute.xlu0 %1041
        %1045 = vset.pattern.permute.xlu0 0
        %1046 = vperm.xlu0 %1045, %v1016
        %v1047 = vpop.permute.xlu0 %1046
        %1050 = vset.pattern.permute.xlu0 0
        %1051 = vperm.xlu0 %1050, %v1017
        %v1052 = vpop.permute.xlu0 %1051
        %1055 = vset.pattern.permute.xlu0 0
        %1056 = vperm.xlu0 %1055, %v1018
        %v1057 = vpop.permute.xlu0 %1056
        %v1059 = vmul.f32 %v583, %v1022
        %v1060 = vmul.f32 %v584, %v1027
        %v1061 = vmul.f32 %v585, %v1032
        %v1062 = vmul.f32 %v586, %v1037
        %v1063 = vmul.f32 %v587, %v1042
        %v1064 = vmul.f32 %v588, %v1047
        %v1065 = vmul.f32 %v589, %v1052
        %v1066 = vmul.f32 %v590, %v1057
        %1067 = vxpose.xlu0.b32.start [1/16] %v1059, 128
        %1068 = vxpose.xlu0.b32.cont [2/16] %v1060, 128
        %1069 = vxpose.xlu0.b32.cont [3/16] %v1061, 128
        %1070 = vxpose.xlu0.b32.cont [4/16] %v1062, 128
        %1071 = vxpose.xlu0.b32.cont [5/16] %v1063, 128
        %1072 = vxpose.xlu0.b32.cont [6/16] %v1064, 128
        %1073 = vxpose.xlu0.b32.cont [7/16] %v1065, 128
        %1074 = vxpose.xlu0.b32.cont [8/16] %v1066, 128
        %1075 = vxpose.xlu0.b32.cont [9/16] 0.0, 128
        %1076 = vxpose.xlu0.b32.cont [10/16] 0.0, 128
        %1077 = vxpose.xlu0.b32.cont [11/16] 0.0, 128
        %1078 = vxpose.xlu0.b32.cont [12/16] 0.0, 128
        %1079 = vxpose.xlu0.b32.cont [13/16] 0.0, 128
        %1080 = vxpose.xlu0.b32.cont [14/16] 0.0, 128
        %1081 = vxpose.xlu0.b32.cont [15/16] 0.0, 128
        %1082 = vxpose.xlu0.b32.end [16/16] 0.0, 128
        %v1083 = vpop.trf.xlu0
        %v1084 = vpop.trf.xlu0
        %v1085 = vpop.trf.xlu0
        %v1086 = vpop.trf.xlu0
        %v1087 = vpop.trf.xlu0
        %v1088 = vpop.trf.xlu0
        %v1089 = vpop.trf.xlu0
        %v1090 = vpop.trf.xlu0
        %v1091 = vpop.trf.xlu0
        %v1092 = vpop.trf.xlu0
        %v1093 = vpop.trf.xlu0
        %v1094 = vpop.trf.xlu0
        %v1095 = vpop.trf.xlu0
        %v1096 = vpop.trf.xlu0
        %v1097 = vpop.trf.xlu0
        %v1098 = vpop.trf.xlu0
        %vm1099 = vcmask 523264
        %v1101 = vsel %vm1099, %v1083, 0
        %1103 = vmatprep.subr.mxu0 0.0
        %1104 = vmatpush1.msra.mxu0 %v844
        %1105 = vmatprep.subr.mxu0 0.0
        %1106 = vmatpush1.msra.mxu0 %v846
        %1107 = vmatprep.subr.mxu0 0.0
        %1108 = vmatpush1.msra.mxu0 %v848
        %1109 = vmatprep.subr.mxu0 0.0
        %1110 = vmatpush1.msra.mxu0 %v850
        %1111 = vmatprep.subr.mxu0 0.0
        %1112 = vmatpush1.msra.mxu0 %v852
        %1113 = vmatprep.subr.mxu0 0.0
        %1114 = vmatpush1.msra.mxu0 %v854
        %1115 = vmatprep.subr.mxu0 0.0
        %1116 = vmatpush1.msra.mxu0 %v856
        %1117 = vmatprep.subr.mxu0 0.0
        %1118 = vmatpush1.msra.mxu0 %v858
        %1119 = vmatprep.subr.mxu0 0.0
        %1120 = vmatpush1.msra.mxu0 0.0
        %1121 = vmatprep.subr.mxu0 0.0
        %1122 = vmatpush1.msra.mxu0 0.0
        %1123 = vmatprep.subr.mxu0 0.0
        %1124 = vmatpush1.msra.mxu0 0.0
        %1125 = vmatprep.subr.mxu0 0.0
        %1126 = vmatpush1.msra.mxu0 0.0
        %1127 = vmatprep.subr.mxu0 0.0
        %1128 = vmatpush1.msra.mxu0 0.0
        %1129 = vmatprep.subr.mxu0 0.0
        %1130 = vmatpush1.msra.mxu0 0.0
        %1131 = vmatprep.subr.mxu0 0.0
        %1132 = vmatpush1.msra.mxu0 0.0
        %1133 = vmatprep.subr.mxu0 0.0
        %1134 = vmatpush1.msra.mxu0 0.0
        %1135 = vmatprep.subr.mxu0 0.0
        %1136 = vmatpush1.msra.mxu0 0.0
        %1137 = vmatprep.subr.mxu0 0.0
        %1138 = vmatpush1.msra.mxu0 0.0
        %1139 = vmatprep.subr.mxu0 0.0
        %1140 = vmatpush1.msra.mxu0 0.0
        %1141 = vmatprep.subr.mxu0 0.0
        %1142 = vmatpush1.msra.mxu0 0.0
        %1143 = vmatprep.subr.mxu0 0.0
        %1144 = vmatpush1.msra.mxu0 0.0
        %1145 = vmatprep.subr.mxu0 0.0
        %1146 = vmatpush1.msra.mxu0 0.0
        %1147 = vmatprep.subr.mxu0 0.0
        %1148 = vmatpush1.msra.mxu0 0.0
        %1149 = vmatprep.subr.mxu0 0.0
        %1150 = vmatpush1.msra.mxu0 0.0
        %1151 = vmatprep.subr.mxu0 0.0
        %1152 = vmatpush1.msra.mxu0 0.0
        %1153 = vmatprep.subr.mxu0 0.0
        %1154 = vmatpush1.msra.mxu0 0.0
        %1155 = vmatprep.subr.mxu0 0.0
        %1156 = vmatpush1.msra.mxu0 0.0
        %1157 = vmatprep.subr.mxu0 0.0
        %1158 = vmatpush1.msra.mxu0 0.0
        %1159 = vmatprep.subr.mxu0 0.0
        %1160 = vmatpush1.msra.mxu0 0.0
        %1161 = vmatprep.subr.mxu0 0.0
        %1162 = vmatpush1.msra.mxu0 0.0
        %1163 = vmatprep.subr.mxu0 0.0
        %1164 = vmatpush1.msra.mxu0 0.0
        %1165 = vmatprep.subr.mxu0 0.0
        %1166 = vmatpush1.msra.mxu0 0.0
        %1167 = vmatprep.mubr.f32.mxu0 0.0
        %1168 = vmatmul.mubr.f32.gmra.mrb[0].mxu0 %v1101
        %v1169 = vpop.f32.mrb[0].mxu0
        %v1170 = vadd.f32 0.0, %v1169
        %v1171 = vpop.f32.mrb[0].mxu0
        %1172 = vdwg.mxu0
        %v1173 = vld [vmem:[#allocation6] sm:$0xff]
        %v1174 = vadd.f32 %v1173, %v1170
        %1175 = vst.msk [vmem:[#allocation6] sm:$0xff] %vm444, %v1174
        %v1176 = vld [vmem:[#allocation7] sm:$0x1]
        %v1177 = vsel %vm444, %v1059, 0.0
        %v1178 = vsel %vm444, %v1060, 0.0
        %v1179 = vadd.f32 %v1177, %v1178
        %v1180 = vsel %vm444, %v1061, 0.0
        %v1181 = vadd.f32 %v1179, %v1180
        %v1182 = vsel %vm444, %v1062, 0.0
        %v1183 = vadd.f32 %v1181, %v1182
        %v1184 = vsel %vm444, %v1063, 0.0
        %v1185 = vadd.f32 %v1183, %v1184
        %v1186 = vsel %vm444, %v1064, 0.0
        %v1187 = vadd.f32 %v1185, %v1186
        %v1188 = vsel %vm444, %v1065, 0.0
        %v1189 = vadd.f32 %v1187, %v1188
        %v1190 = vsel %vm444, %v1066, 0.0
        %v1191 = vadd.f32 %v1189, %v1190
        %v1192 = vrot.slane %v1191, 4
        %v1193 = vadd.f32 %v1191, %v1192
        %v1194 = vrot.slane %v1193, 2
        %v1195 = vadd.f32 %v1193, %v1194
        %v1196 = vrot.slane %v1195, 1
        %v1197 = vadd.f32 %v1195, %v1196
        %v1198 = vadd.f32 %v1176, %v1197
        %vm1199 = vcmask 57344
        %1200 = vst.msk [vmem:[#allocation7] sm:$0x1] %vm1199, %v1198
        // Predicated region
        $region37: #{tpu_custom_call.1} parent=31 // pred_check
          %p1201 = pneg %p132
        $region38: #{tpu_custom_call.1} parent=31 // pred_check_branch
          %1203 = sbr.rel (%p1201) target = $region40
        $region39: #{tpu_custom_call.1} parent=31 // pred_region
          %s1205 = ssub.s32 16, 16
          %1206 = vsyncadd [#allocation3], %s1205
          %s1207 = smul.addr %s25, 16
          %s1208 = scalar_lea.hbm %s3, %s1207
          %s1210 = sshll.u32 [#allocation2], 4
          %s1211 = int_to_ptr.vmem [resolvable:$true] %s1210
          %1213 = dma.vmem_to_hbm [thread:$0]  %s1211, 16, %s1208, [#allocation3]
        $region40: #{tpu_custom_call.1} parent=31 // pred_fallthru
          _
        // Predicated region
        $region41: #{tpu_custom_call.1} parent=31 // pred_check
          %p1214 = pneg %p158
        $region42: #{tpu_custom_call.1} parent=31 // pred_check_branch
          %1216 = sbr.rel (%p1214) target = $region44
        $region43: #{tpu_custom_call.1} parent=31 // pred_region
          %s1218 = ssub.s32 16, 16
          %1219 = vsyncadd [#allocation5], %s1218
          %s1220 = smul.addr %s25, 16
          %s1221 = scalar_lea.hbm %s4, %s1220
          %s1223 = sshll.u32 [#allocation4], 4
          %s1224 = int_to_ptr.vmem [resolvable:$true] %s1223
          %1226 = dma.vmem_to_hbm [thread:$0]  %s1224, 16, %s1221, [#allocation5]
        $region44: #{tpu_custom_call.1} parent=31 // pred_fallthru
          _
        // Predicated region
        $region45: #{tpu_custom_call.1} parent=31 // pred_check
          %p1227 = pneg %p184
        $region46: #{tpu_custom_call.1} parent=31 // pred_check_branch
          %1229 = sbr.rel (%p1227) target = $region48
        $region47: #{tpu_custom_call.1} parent=31 // pred_region
          %s1231 = ssub.s32 128, 128
          %1232 = vsyncadd [#allocation5], %s1231
          %s1233 = smul.addr %s25, 128
          %s1234 = scalar_lea.hbm %s5, %s1233
          %s1236 = sshll.u32 [#allocation6], 4
          %s1237 = int_to_ptr.vmem [resolvable:$true] %s1236
          %1239 = dma.vmem_to_hbm [thread:$0]  %s1237, 128, %s1234, [#allocation5]
        $region48: #{tpu_custom_call.1} parent=31 // pred_fallthru
          _
        // Predicated region
        $region49: #{tpu_custom_call.1} parent=31 // pred_check
          %p1240 = pneg %p210
        $region50: #{tpu_custom_call.1} parent=31 // pred_check_branch
          %1242 = sbr.rel (%p1240) target = $region52
        $region51: #{tpu_custom_call.1} parent=31 // pred_region
          %s1244 = ssub.s32 16, 16
          %1245 = vsyncadd [#allocation8], %s1244
          %s1246 = smul.addr %s25, 16
          %s1247 = scalar_lea.hbm %s6, %s1246
          %s1249 = sshll.u32 [#allocation7], 4
          %s1250 = int_to_ptr.vmem [resolvable:$true] %s1249
          %1252 = dma.vmem_to_hbm [thread:$0]  %s1250, 16, %s1247, [#allocation8]
        $region52: #{tpu_custom_call.1} parent=31 // pred_fallthru
          _
        // Predicated region
        $region53: #{tpu_custom_call.1} parent=31 // pred_check
          %p1253 = pneg %p132
        $region54: #{tpu_custom_call.1} parent=31 // pred_check_branch
          %1255 = sbr.rel (%p1253) target = $region56
        $region55: #{tpu_custom_call.1} parent=31 // pred_region
          %1256 = dma.done [#allocation3], 16
        $region56: #{tpu_custom_call.1} parent=31 // pred_fallthru
          _
        // Predicated region
        $region57: #{tpu_custom_call.1} parent=31 // pred_check
          %p1257 = pneg %p158
        $region58: #{tpu_custom_call.1} parent=31 // pred_check_branch
          %1259 = sbr.rel (%p1257) target = $region60
        $region59: #{tpu_custom_call.1} parent=31 // pred_region
          %1260 = dma.done [#allocation5], 16
        $region60: #{tpu_custom_call.1} parent=31 // pred_fallthru
          _
        // Predicated region
        $region61: #{tpu_custom_call.1} parent=31 // pred_check
          %p1261 = pneg %p184
        $region62: #{tpu_custom_call.1} parent=31 // pred_check_branch
          %1263 = sbr.rel (%p1261) target = $region64
        $region63: #{tpu_custom_call.1} parent=31 // pred_region
          %1264 = dma.done [#allocation5], 128
        $region64: #{tpu_custom_call.1} parent=31 // pred_fallthru
          _
        // Predicated region
        $region65: #{tpu_custom_call.1} parent=31 // pred_check
          %p1265 = pneg %p210
        $region66: #{tpu_custom_call.1} parent=31 // pred_check_branch
          %1267 = sbr.rel (%p1265) target = $region68
        $region67: #{tpu_custom_call.1} parent=31 // pred_region
          %1268 = dma.done [#allocation8], 16
        $region68: #{tpu_custom_call.1} parent=31 // pred_fallthru
          _
      $region32: #{tpu_custom_call.1} parent=5 // pred_fallthru
        _
      %p1269 = scmp.le.s32.totalorder 2, %s16
      // Predicated region
      $region69: #{tpu_custom_call.1} parent=5 // pred_check
        %p1270 = pneg %p1269
      $region70: #{tpu_custom_call.1} parent=5 // pred_check_branch
        %1272 = sbr.rel (%p1270) target = $region72
      $region71: #{tpu_custom_call.1} parent=5 // pred_region
        %s1273 = ssub.s32 %s16, 2
      $region72: #{tpu_custom_call.1} parent=5 // pred_fallthru
        _
    $region6: #{tpu_custom_call.1} parent=1 // loop_footer
      %s20 = sadd.s32 1, %s16
    $region7: #{tpu_custom_call.1} parent=1 // loop_footer_branch
      %15 = sbr.rel target = $region3
    $region8: #{tpu_custom_call.1} parent=1 // loop_exit
      _
    %1274 = vsyncpa [#allocation3], 1
    %s1275 = scalar_lea.sflag [#allocation3], 1
    %1276 = vsyncpa %s1275, 1
    %1277 = vsyncpa [#allocation5], 1
    %1278 = vsyncpa [#allocation8], 1

</llo_original>
